<compile_context>
chip_gen: v6e
topology: v6e:2x2x1
jax: 0.10.0
libtpu: 0.0.40
codegen_flags: <defaults>
</compile_context>

<pallas_src>
import functools

import jax
import jax.numpy as jnp
from jax.experimental import pallas as pl
from jax.experimental.pallas import tpu as pltpu

LEAK = 0.2  # LeakyReLU negative slope


def _lrelu(x):
    return jnp.where(x > 0, x, LEAK * x)


def _round_up(x, m):
    return ((x + m - 1) // m) * m


# ---------------------------------------------------------------------------
# Fused kernel: shared MLP (4 x Linear+LReLU) -> D unshared heads
# (3 x Linear+LReLU, Linear(H->S)+LReLU) -> one-hot domain select.
# One batch block [TB, *] per grid step; all weights full-extent in VMEM.
# ---------------------------------------------------------------------------
def fused_kernel(z_ref, ym_ref, ws0_ref, bs0_ref, ws_ref, bs_ref,
                 wu_ref, bu_ref, wuo_ref, buo_ref, out_ref):
    # z_ref  [TB, Kp]  bf16        ym_ref  [TB, Dp]      f32 (one-hot)
    # ws0    [Kp, H]   bf16        bs0     [1, H]        f32
    # ws     [L, H, H] bf16        bs      [L, 1, H]     f32
    # wu     [D,Lu,H,H] bf16       bu      [D, Lu, 1, H] f32
    # wuo    [D, H, Sp] bf16       buo     [D, 1, Sp]    f32
    # out    [TB, Sp]  f32
    bf16, f32 = jnp.bfloat16, jnp.float32

    # ---- shared 4-layer MLP, M = TB rows per matmul ------------------------
    h = _lrelu(jnp.dot(z_ref[...], ws0_ref[...],
                       preferred_element_type=f32) + bs0_ref[...])
    for l in range(ws_ref.shape[0]):                 # static unroll (L = 3)
        h = _lrelu(jnp.dot(h.astype(bf16), ws_ref[l],
                           preferred_element_type=f32) + bs_ref[l])

    # ---- all D unshared heads over the full block, one-hot select ----------
    ym = ym_ref[...]                                 # [TB, Dp] f32, exact 0/1
    out = jnp.zeros(out_ref.shape, f32)
    for d in range(wu_ref.shape[0]):                 # static unroll (D = 2)
        hd = h
        for l in range(wu_ref.shape[1]):             # static unroll (Lu = 3)
            hd = _lrelu(jnp.dot(hd.astype(bf16), wu_ref[d, l],
                                preferred_element_type=f32) + bu_ref[d, l])
        sd = _lrelu(jnp.dot(hd.astype(bf16), wuo_ref[d],
                            preferred_element_type=f32) + buo_ref[d])
        out = out + ym[:, d:d + 1] * sd
    out_ref[...] = out


# ---------------------------------------------------------------------------
# One-time parameter packing (hoisted out of the per-call path).
# ---------------------------------------------------------------------------
def pack_params(params):
    bf16, f32 = jnp.bfloat16, jnp.float32
    latent, H = params["ws0"].shape
    D = params["wu"].shape[0]
    S = params["wuo"].shape[-1]
    Kp = _round_up(latent, 128)
    Sp = _round_up(S, 128)
    packed = {
        "ws0": jnp.zeros((Kp, H), bf16).at[:latent, :].set(params["ws0"].astype(bf16)),
        "bs0": params["bs0"].astype(f32),
        "ws":  params["ws"].astype(bf16),
        "bs":  params["bs"].astype(f32),
        "wu":  params["wu"].astype(bf16),
        "bu":  params["bu"].astype(f32),
        "wuo": jnp.zeros((D, H, Sp), bf16).at[:, :, :S].set(params["wuo"].astype(bf16)),
        "buo": jnp.zeros((D, 1, Sp), f32).at[:, :, :S].set(params["buo"].astype(f32)),
    }
    return packed


@functools.partial(jax.jit, static_argnames=("latent_dim", "style_dim"))
def mapping_network_pallas(z, y, packed, *, latent_dim, style_dim):
    B = z.shape[0]
    Kp, H = packed["ws0"].shape
    L = packed["ws"].shape[0]
    D, Lu = packed["wu"].shape[0], packed["wu"].shape[1]
    Sp = packed["wuo"].shape[-1]
    Dp = _round_up(D, 128)

    bf16, f32 = jnp.bfloat16, jnp.float32

    # Per-call input prep only (tiny): pad z to a lane-full contraction dim
    # and build the exact {0,1} one-hot domain mask from (clamped) y.
    zp = jnp.zeros((B, Kp), bf16).at[:, :latent_dim].set(z.astype(bf16))
    yc = jnp.clip(y.astype(jnp.int32), 0, D - 1)
    ymask = jax.nn.one_hot(yc, Dp, dtype=f32)               # [B, Dp]

    # Batch tile: largest power-of-two multiple of 8 dividing B (<= 256) so
    # stores are full-sublane and large B gives a >1-block "parallel" grid
    # (both v7x TensorCores). Demo B=8 -> one block.
    TB = B
    for cand in (256, 128, 64, 32, 16, 8):
        if B % cand == 0:
            TB = cand
            break

    out_p = pl.pallas_call(
        fused_kernel,
        out_shape=jax.ShapeDtypeStruct((B, Sp), f32),
        grid_spec=pltpu.PrefetchScalarGridSpec(
            num_scalar_prefetch=0,
            grid=(B // TB,),
            in_specs=[
                pl.BlockSpec((TB, Kp),        lambda i: (i, 0)),
                pl.BlockSpec((TB, Dp),        lambda i: (i, 0)),
                pl.BlockSpec((Kp, H),         lambda i: (0, 0)),
                pl.BlockSpec((1, H),          lambda i: (0, 0)),
                pl.BlockSpec((L, H, H),       lambda i: (0, 0, 0)),
                pl.BlockSpec((L, 1, H),       lambda i: (0, 0, 0)),
                pl.BlockSpec((D, Lu, H, H),   lambda i: (0, 0, 0, 0)),
                pl.BlockSpec((D, Lu, 1, H),   lambda i: (0, 0, 0, 0)),
                pl.BlockSpec((D, H, Sp),      lambda i: (0, 0, 0)),
                pl.BlockSpec((D, 1, Sp),      lambda i: (0, 0, 0)),
            ],
            out_specs=pl.BlockSpec((TB, Sp), lambda i: (i, 0)),
        ),
        compiler_params=pltpu.CompilerParams(
            dimension_semantics=("parallel",)),
    )(zp, ymask, packed["ws0"], packed["bs0"], packed["ws"], packed["bs"],
      packed["wu"], packed["bu"], packed["wuo"], packed["buo"])

    return out_p[:, :style_dim]


# ---------------------------------------------------------------------------
# Pure-JAX reference (same bf16-operand / f32-accumulation precision).
# ---------------------------------------------------------------------------
def mapping_network_ref(z, y, params):
    bf16 = jnp.bfloat16

    def dot16(a, w):
        return jnp.dot(a.astype(bf16), w.astype(bf16),
                       preferred_element_type=jnp.float32)

    h = _lrelu(dot16(z, params["ws0"]) + params["bs0"])
    for l in range(params["ws"].shape[0]):
        h = _lrelu(dot16(h, params["ws"][l]) + params["bs"][l])
    outs = []
    for d in range(params["wu"].shape[0]):
        hd = h
        for l in range(params["wu"].shape[1]):
            hd = _lrelu(dot16(hd, params["wu"][d, l]) + params["bu"][d, l])
        # _create_block ends with LeakyReLU, so the last layer is activated too.
        outs.append(_lrelu(dot16(hd, params["wuo"][d]) + params["buo"][d]))
    out = jnp.stack(outs, axis=1)                 # [B, D, S]
    return out[jnp.arange(z.shape[0]), y]         # [B, S]


def init_params(key, latent_dim, hidden, style_dim, num_domains):
    ks = jax.random.split(key, 8)
    scale = 0.1
    return {
        "ws0": scale * jax.random.normal(ks[0], (latent_dim, hidden), jnp.float32),
        "bs0": scale * jax.random.normal(ks[1], (1, hidden), jnp.float32),
        "ws":  scale * jax.random.normal(ks[2], (3, hidden, hidden), jnp.float32),
        "bs":  scale * jax.random.normal(ks[3], (3, 1, hidden), jnp.float32),
        "wu":  scale * jax.random.normal(ks[4], (num_domains, 3, hidden, hidden), jnp.float32),
        "bu":  scale * jax.random.normal(ks[5], (num_domains, 3, 1, hidden), jnp.float32),
        "wuo": scale * jax.random.normal(ks[6], (num_domains, hidden, style_dim), jnp.float32),
        "buo": scale * jax.random.normal(ks[7], (num_domains, 1, style_dim), jnp.float32),
    }


if __name__ == "__main__":
    # z: [B, latent_dim], y: [B] integer domain labels in [0, num_domains)
    B, LATENT, HIDDEN, STYLE, DOMAINS = 8, 16, 128, 64, 2

    key = jax.random.PRNGKey(0)
    kz, ky, kp = jax.random.split(key, 3)
    z = jax.random.normal(kz, (B, LATENT), jnp.float32)
    y = jax.random.randint(ky, (B,), 0, DOMAINS, jnp.int32)
    params = init_params(kp, LATENT, HIDDEN, STYLE, DOMAINS)

    packed = pack_params(params)          # one-time packing, outside call path
    s = mapping_network_pallas(z, y, packed, latent_dim=LATENT, style_dim=STYLE)
    jax.block_until_ready(s)

    s_ref = mapping_network_ref(z, y, params)
    assert s.shape == (B, STYLE), s.shape
    max_err = float(jnp.max(jnp.abs(s - s_ref)))
    # Both paths use bf16 MXU operands with f32 accumulation and an exact
    # {0,1} domain select, so the tolerance can stay tight.
    assert max_err < 2e-3, max_err
    print("KERNEL_OK")
</pallas_src>

<mosaic_0001>
module attributes {stable_mosaic.version = 11 : i64} {
  func.func @fused_kernel(%arg0: i32, %arg1: memref<8x128xbf16, #tpu.memory_space<vmem>>, %arg2: memref<8x128xf32, #tpu.memory_space<vmem>>, %arg3: memref<128x128xbf16, #tpu.memory_space<vmem>>, %arg4: memref<1x128xf32, #tpu.memory_space<vmem>>, %arg5: memref<3x128x128xbf16, #tpu.memory_space<vmem>>, %arg6: memref<3x1x128xf32, #tpu.memory_space<vmem>>, %arg7: memref<2x3x128x128xbf16, #tpu.memory_space<vmem>>, %arg8: memref<2x3x1x128xf32, #tpu.memory_space<vmem>>, %arg9: memref<2x128x128xbf16, #tpu.memory_space<vmem>>, %arg10: memref<2x1x128xf32, #tpu.memory_space<vmem>>, %arg11: memref<8x128xf32, #tpu.memory_space<vmem>>) attributes {dimension_semantics = [#tpu.dimension_semantics<parallel>], iteration_bounds = array<i64: 1>, scalar_prefetch = 0 : i64, scratch_operands = 0 : i64, tpu.core_type = #tpu.core_type<tc>, window_params = [{transform_indices = @transform_0, window_bounds = array<i64: 8, 128>}, {transform_indices = @transform_1, window_bounds = array<i64: 8, 128>}, {pipeline_mode = #tpu.pipeline_mode<synchronous>, transform_indices = @transform_2, window_bounds = array<i64: 128, 128>}, {pipeline_mode = #tpu.pipeline_mode<synchronous>, transform_indices = @transform_3, window_bounds = array<i64: 1, 128>}, {pipeline_mode = #tpu.pipeline_mode<synchronous>, transform_indices = @transform_4, window_bounds = array<i64: 3, 128, 128>}, {pipeline_mode = #tpu.pipeline_mode<synchronous>, transform_indices = @transform_5, window_bounds = array<i64: 3, 1, 128>}, {pipeline_mode = #tpu.pipeline_mode<synchronous>, transform_indices = @transform_6, window_bounds = array<i64: 2, 3, 128, 128>}, {pipeline_mode = #tpu.pipeline_mode<synchronous>, transform_indices = @transform_7, window_bounds = array<i64: 2, 3, 1, 128>}, {pipeline_mode = #tpu.pipeline_mode<synchronous>, transform_indices = @transform_8, window_bounds = array<i64: 2, 128, 128>}, {pipeline_mode = #tpu.pipeline_mode<synchronous>, transform_indices = @transform_9, window_bounds = array<i64: 2, 1, 128>}, {transform_indices = @transform_10, window_bounds = array<i64: 8, 128>}]} {
    %c0 = arith.constant 0 : index
    %c0_0 = arith.constant 0 : index
    %0 = vector.load %arg1[%c0, %c0_0] : memref<8x128xbf16, #tpu.memory_space<vmem>>, vector<8x128xbf16>
    %c0_1 = arith.constant 0 : index
    %c0_2 = arith.constant 0 : index
    %1 = vector.load %arg3[%c0_1, %c0_2] : memref<128x128xbf16, #tpu.memory_space<vmem>>, vector<128x128xbf16>
    %cst = arith.constant dense<0.000000e+00> : vector<8x128xf32>
    %2 = tpu.matmul %0, %1, %cst {dimension_numbers = #tpu.dot_dimension_numbers<[1], [0], [0], [1], [0, 0, 1, 1], [], []>} : vector<8x128xbf16>, vector<128x128xbf16>, vector<8x128xf32> -> vector<8x128xf32>
    %c0_3 = arith.constant 0 : index
    %c0_4 = arith.constant 0 : index
    %3 = vector.load %arg4[%c0_3, %c0_4] : memref<1x128xf32, #tpu.memory_space<vmem>>, vector<1x128xf32>
    %4 = vector.broadcast %3 : vector<1x128xf32> to vector<8x128xf32>
    %5 = arith.addf %2, %4 : vector<8x128xf32>
    %cst_5 = arith.constant 0.000000e+00 : f32
    %6 = vector.broadcast %cst_5 : f32 to vector<8x128xf32>
    %7 = arith.cmpf ogt, %5, %6 : vector<8x128xf32>
    %cst_6 = arith.constant 2.000000e-01 : f32
    %8 = vector.broadcast %cst_6 : f32 to vector<8x128xf32>
    %9 = arith.mulf %8, %5 : vector<8x128xf32>
    %10 = arith.select %7, %5, %9 : vector<8x128xi1>, vector<8x128xf32>
    %11 = arith.truncf %10 : vector<8x128xf32> to vector<8x128xbf16>
    %c0_7 = arith.constant 0 : index
    %c0_8 = arith.constant 0 : index
    %c0_9 = arith.constant 0 : index
    %12 = vector.load %arg5[%c0_7, %c0_8, %c0_9] : memref<3x128x128xbf16, #tpu.memory_space<vmem>>, vector<1x128x128xbf16>
    %13 = vector.shape_cast %12 : vector<1x128x128xbf16> to vector<128x128xbf16>
    %cst_10 = arith.constant dense<0.000000e+00> : vector<8x128xf32>
    %14 = tpu.matmul %11, %13, %cst_10 {dimension_numbers = #tpu.dot_dimension_numbers<[1], [0], [0], [1], [0, 0, 1, 1], [], []>} : vector<8x128xbf16>, vector<128x128xbf16>, vector<8x128xf32> -> vector<8x128xf32>
    %c0_11 = arith.constant 0 : index
    %c0_12 = arith.constant 0 : index
    %c0_13 = arith.constant 0 : index
    %15 = vector.load %arg6[%c0_11, %c0_12, %c0_13] : memref<3x1x128xf32, #tpu.memory_space<vmem>>, vector<1x1x128xf32>
    %16 = vector.shape_cast %15 : vector<1x1x128xf32> to vector<1x128xf32>
    %17 = vector.broadcast %16 : vector<1x128xf32> to vector<8x128xf32>
    %18 = arith.addf %14, %17 : vector<8x128xf32>
    %cst_14 = arith.constant 0.000000e+00 : f32
    %19 = vector.broadcast %cst_14 : f32 to vector<8x128xf32>
    %20 = arith.cmpf ogt, %18, %19 : vector<8x128xf32>
    %cst_15 = arith.constant 2.000000e-01 : f32
    %21 = vector.broadcast %cst_15 : f32 to vector<8x128xf32>
    %22 = arith.mulf %21, %18 : vector<8x128xf32>
    %23 = arith.select %20, %18, %22 : vector<8x128xi1>, vector<8x128xf32>
    %24 = arith.truncf %23 : vector<8x128xf32> to vector<8x128xbf16>
    %c1 = arith.constant 1 : index
    %c0_16 = arith.constant 0 : index
    %c0_17 = arith.constant 0 : index
    %25 = vector.load %arg5[%c1, %c0_16, %c0_17] : memref<3x128x128xbf16, #tpu.memory_space<vmem>>, vector<1x128x128xbf16>
    %26 = vector.shape_cast %25 : vector<1x128x128xbf16> to vector<128x128xbf16>
    %cst_18 = arith.constant dense<0.000000e+00> : vector<8x128xf32>
    %27 = tpu.matmul %24, %26, %cst_18 {dimension_numbers = #tpu.dot_dimension_numbers<[1], [0], [0], [1], [0, 0, 1, 1], [], []>} : vector<8x128xbf16>, vector<128x128xbf16>, vector<8x128xf32> -> vector<8x128xf32>
    %c1_19 = arith.constant 1 : index
    %c0_20 = arith.constant 0 : index
    %c0_21 = arith.constant 0 : index
    %28 = vector.load %arg6[%c1_19, %c0_20, %c0_21] : memref<3x1x128xf32, #tpu.memory_space<vmem>>, vector<1x1x128xf32>
    %29 = vector.shape_cast %28 : vector<1x1x128xf32> to vector<1x128xf32>
    %30 = vector.broadcast %29 : vector<1x128xf32> to vector<8x128xf32>
    %31 = arith.addf %27, %30 : vector<8x128xf32>
    %cst_22 = arith.constant 0.000000e+00 : f32
    %32 = vector.broadcast %cst_22 : f32 to vector<8x128xf32>
    %33 = arith.cmpf ogt, %31, %32 : vector<8x128xf32>
    %cst_23 = arith.constant 2.000000e-01 : f32
    %34 = vector.broadcast %cst_23 : f32 to vector<8x128xf32>
    %35 = arith.mulf %34, %31 : vector<8x128xf32>
    %36 = arith.select %33, %31, %35 : vector<8x128xi1>, vector<8x128xf32>
    %37 = arith.truncf %36 : vector<8x128xf32> to vector<8x128xbf16>
    %c2 = arith.constant 2 : index
    %c0_24 = arith.constant 0 : index
    %c0_25 = arith.constant 0 : index
    %38 = vector.load %arg5[%c2, %c0_24, %c0_25] : memref<3x128x128xbf16, #tpu.memory_space<vmem>>, vector<1x128x128xbf16>
    %39 = vector.shape_cast %38 : vector<1x128x128xbf16> to vector<128x128xbf16>
    %cst_26 = arith.constant dense<0.000000e+00> : vector<8x128xf32>
    %40 = tpu.matmul %37, %39, %cst_26 {dimension_numbers = #tpu.dot_dimension_numbers<[1], [0], [0], [1], [0, 0, 1, 1], [], []>} : vector<8x128xbf16>, vector<128x128xbf16>, vector<8x128xf32> -> vector<8x128xf32>
    %c2_27 = arith.constant 2 : index
    %c0_28 = arith.constant 0 : index
    %c0_29 = arith.constant 0 : index
    %41 = vector.load %arg6[%c2_27, %c0_28, %c0_29] : memref<3x1x128xf32, #tpu.memory_space<vmem>>, vector<1x1x128xf32>
    %42 = vector.shape_cast %41 : vector<1x1x128xf32> to vector<1x128xf32>
    %43 = vector.broadcast %42 : vector<1x128xf32> to vector<8x128xf32>
    %44 = arith.addf %40, %43 : vector<8x128xf32>
    %cst_30 = arith.constant 0.000000e+00 : f32
    %45 = vector.broadcast %cst_30 : f32 to vector<8x128xf32>
    %46 = arith.cmpf ogt, %44, %45 : vector<8x128xf32>
    %cst_31 = arith.constant 2.000000e-01 : f32
    %47 = vector.broadcast %cst_31 : f32 to vector<8x128xf32>
    %48 = arith.mulf %47, %44 : vector<8x128xf32>
    %49 = arith.select %46, %44, %48 : vector<8x128xi1>, vector<8x128xf32>
    %c0_32 = arith.constant 0 : index
    %c0_33 = arith.constant 0 : index
    %50 = vector.load %arg2[%c0_32, %c0_33] : memref<8x128xf32, #tpu.memory_space<vmem>>, vector<8x128xf32>
    %cst_34 = arith.constant 0.000000e+00 : f32
    %51 = vector.broadcast %cst_34 : f32 to vector<8x128xf32>
    %52 = arith.truncf %49 : vector<8x128xf32> to vector<8x128xbf16>
    %c0_35 = arith.constant 0 : index
    %c0_36 = arith.constant 0 : index
    %c0_37 = arith.constant 0 : index
    %c0_38 = arith.constant 0 : index
    %53 = vector.load %arg7[%c0_35, %c0_36, %c0_37, %c0_38] : memref<2x3x128x128xbf16, #tpu.memory_space<vmem>>, vector<1x1x128x128xbf16>
    %54 = vector.shape_cast %53 : vector<1x1x128x128xbf16> to vector<128x128xbf16>
    %cst_39 = arith.constant dense<0.000000e+00> : vector<8x128xf32>
    %55 = tpu.matmul %52, %54, %cst_39 {dimension_numbers = #tpu.dot_dimension_numbers<[1], [0], [0], [1], [0, 0, 1, 1], [], []>} : vector<8x128xbf16>, vector<128x128xbf16>, vector<8x128xf32> -> vector<8x128xf32>
    %c0_40 = arith.constant 0 : index
    %c0_41 = arith.constant 0 : index
    %c0_42 = arith.constant 0 : index
    %c0_43 = arith.constant 0 : index
    %56 = vector.load %arg8[%c0_40, %c0_41, %c0_42, %c0_43] : memref<2x3x1x128xf32, #tpu.memory_space<vmem>>, vector<1x1x1x128xf32>
    %57 = vector.shape_cast %56 : vector<1x1x1x128xf32> to vector<1x128xf32>
    %58 = vector.broadcast %57 : vector<1x128xf32> to vector<8x128xf32>
    %59 = arith.addf %55, %58 : vector<8x128xf32>
    %cst_44 = arith.constant 0.000000e+00 : f32
    %60 = vector.broadcast %cst_44 : f32 to vector<8x128xf32>
    %61 = arith.cmpf ogt, %59, %60 : vector<8x128xf32>
    %cst_45 = arith.constant 2.000000e-01 : f32
    %62 = vector.broadcast %cst_45 : f32 to vector<8x128xf32>
    %63 = arith.mulf %62, %59 : vector<8x128xf32>
    %64 = arith.select %61, %59, %63 : vector<8x128xi1>, vector<8x128xf32>
    %65 = arith.truncf %64 : vector<8x128xf32> to vector<8x128xbf16>
    %c0_46 = arith.constant 0 : index
    %c1_47 = arith.constant 1 : index
    %c0_48 = arith.constant 0 : index
    %c0_49 = arith.constant 0 : index
    %66 = vector.load %arg7[%c0_46, %c1_47, %c0_48, %c0_49] : memref<2x3x128x128xbf16, #tpu.memory_space<vmem>>, vector<1x1x128x128xbf16>
    %67 = vector.shape_cast %66 : vector<1x1x128x128xbf16> to vector<128x128xbf16>
    %cst_50 = arith.constant dense<0.000000e+00> : vector<8x128xf32>
    %68 = tpu.matmul %65, %67, %cst_50 {dimension_numbers = #tpu.dot_dimension_numbers<[1], [0], [0], [1], [0, 0, 1, 1], [], []>} : vector<8x128xbf16>, vector<128x128xbf16>, vector<8x128xf32> -> vector<8x128xf32>
    %c0_51 = arith.constant 0 : index
    %c1_52 = arith.constant 1 : index
    %c0_53 = arith.constant 0 : index
    %c0_54 = arith.constant 0 : index
    %69 = vector.load %arg8[%c0_51, %c1_52, %c0_53, %c0_54] : memref<2x3x1x128xf32, #tpu.memory_space<vmem>>, vector<1x1x1x128xf32>
    %70 = vector.shape_cast %69 : vector<1x1x1x128xf32> to vector<1x128xf32>
    %71 = vector.broadcast %70 : vector<1x128xf32> to vector<8x128xf32>
    %72 = arith.addf %68, %71 : vector<8x128xf32>
    %cst_55 = arith.constant 0.000000e+00 : f32
    %73 = vector.broadcast %cst_55 : f32 to vector<8x128xf32>
    %74 = arith.cmpf ogt, %72, %73 : vector<8x128xf32>
    %cst_56 = arith.constant 2.000000e-01 : f32
    %75 = vector.broadcast %cst_56 : f32 to vector<8x128xf32>
    %76 = arith.mulf %75, %72 : vector<8x128xf32>
    %77 = arith.select %74, %72, %76 : vector<8x128xi1>, vector<8x128xf32>
    %78 = arith.truncf %77 : vector<8x128xf32> to vector<8x128xbf16>
    %c0_57 = arith.constant 0 : index
    %c2_58 = arith.constant 2 : index
    %c0_59 = arith.constant 0 : index
    %c0_60 = arith.constant 0 : index
    %79 = vector.load %arg7[%c0_57, %c2_58, %c0_59, %c0_60] : memref<2x3x128x128xbf16, #tpu.memory_space<vmem>>, vector<1x1x128x128xbf16>
    %80 = vector.shape_cast %79 : vector<1x1x128x128xbf16> to vector<128x128xbf16>
    %cst_61 = arith.constant dense<0.000000e+00> : vector<8x128xf32>
    %81 = tpu.matmul %78, %80, %cst_61 {dimension_numbers = #tpu.dot_dimension_numbers<[1], [0], [0], [1], [0, 0, 1, 1], [], []>} : vector<8x128xbf16>, vector<128x128xbf16>, vector<8x128xf32> -> vector<8x128xf32>
    %c0_62 = arith.constant 0 : index
    %c2_63 = arith.constant 2 : index
    %c0_64 = arith.constant 0 : index
    %c0_65 = arith.constant 0 : index
    %82 = vector.load %arg8[%c0_62, %c2_63, %c0_64, %c0_65] : memref<2x3x1x128xf32, #tpu.memory_space<vmem>>, vector<1x1x1x128xf32>
    %83 = vector.shape_cast %82 : vector<1x1x1x128xf32> to vector<1x128xf32>
    %84 = vector.broadcast %83 : vector<1x128xf32> to vector<8x128xf32>
    %85 = arith.addf %81, %84 : vector<8x128xf32>
    %cst_66 = arith.constant 0.000000e+00 : f32
    %86 = vector.broadcast %cst_66 : f32 to vector<8x128xf32>
    %87 = arith.cmpf ogt, %85, %86 : vector<8x128xf32>
    %cst_67 = arith.constant 2.000000e-01 : f32
    %88 = vector.broadcast %cst_67 : f32 to vector<8x128xf32>
    %89 = arith.mulf %88, %85 : vector<8x128xf32>
    %90 = arith.select %87, %85, %89 : vector<8x128xi1>, vector<8x128xf32>
    %91 = arith.truncf %90 : vector<8x128xf32> to vector<8x128xbf16>
    %c0_68 = arith.constant 0 : index
    %c0_69 = arith.constant 0 : index
    %c0_70 = arith.constant 0 : index
    %92 = vector.load %arg9[%c0_68, %c0_69, %c0_70] : memref<2x128x128xbf16, #tpu.memory_space<vmem>>, vector<1x128x128xbf16>
    %93 = vector.shape_cast %92 : vector<1x128x128xbf16> to vector<128x128xbf16>
    %cst_71 = arith.constant dense<0.000000e+00> : vector<8x128xf32>
    %94 = tpu.matmul %91, %93, %cst_71 {dimension_numbers = #tpu.dot_dimension_numbers<[1], [0], [0], [1], [0, 0, 1, 1], [], []>} : vector<8x128xbf16>, vector<128x128xbf16>, vector<8x128xf32> -> vector<8x128xf32>
    %c0_72 = arith.constant 0 : index
    %c0_73 = arith.constant 0 : index
    %c0_74 = arith.constant 0 : index
    %95 = vector.load %arg10[%c0_72, %c0_73, %c0_74] : memref<2x1x128xf32, #tpu.memory_space<vmem>>, vector<1x1x128xf32>
    %96 = vector.shape_cast %95 : vector<1x1x128xf32> to vector<1x128xf32>
    %97 = vector.broadcast %96 : vector<1x128xf32> to vector<8x128xf32>
    %98 = arith.addf %94, %97 : vector<8x128xf32>
    %cst_75 = arith.constant 0.000000e+00 : f32
    %99 = vector.broadcast %cst_75 : f32 to vector<8x128xf32>
    %100 = arith.cmpf ogt, %98, %99 : vector<8x128xf32>
    %cst_76 = arith.constant 2.000000e-01 : f32
    %101 = vector.broadcast %cst_76 : f32 to vector<8x128xf32>
    %102 = arith.mulf %101, %98 : vector<8x128xf32>
    %103 = arith.select %100, %98, %102 : vector<8x128xi1>, vector<8x128xf32>
    %104 = vector.extract_strided_slice %50 {offsets = [0, 0], sizes = [8, 1], strides = [1, 1]} : vector<8x128xf32> to vector<8x1xf32>
    %105 = vector.broadcast %104 : vector<8x1xf32> to vector<8x128xf32>
    %106 = arith.mulf %105, %103 : vector<8x128xf32>
    %107 = arith.addf %51, %106 : vector<8x128xf32>
    %108 = arith.truncf %49 : vector<8x128xf32> to vector<8x128xbf16>
    %c1_77 = arith.constant 1 : index
    %c0_78 = arith.constant 0 : index
    %c0_79 = arith.constant 0 : index
    %c0_80 = arith.constant 0 : index
    %109 = vector.load %arg7[%c1_77, %c0_78, %c0_79, %c0_80] : memref<2x3x128x128xbf16, #tpu.memory_space<vmem>>, vector<1x1x128x128xbf16>
    %110 = vector.shape_cast %109 : vector<1x1x128x128xbf16> to vector<128x128xbf16>
    %cst_81 = arith.constant dense<0.000000e+00> : vector<8x128xf32>
    %111 = tpu.matmul %108, %110, %cst_81 {dimension_numbers = #tpu.dot_dimension_numbers<[1], [0], [0], [1], [0, 0, 1, 1], [], []>} : vector<8x128xbf16>, vector<128x128xbf16>, vector<8x128xf32> -> vector<8x128xf32>
    %c1_82 = arith.constant 1 : index
    %c0_83 = arith.constant 0 : index
    %c0_84 = arith.constant 0 : index
    %c0_85 = arith.constant 0 : index
    %112 = vector.load %arg8[%c1_82, %c0_83, %c0_84, %c0_85] : memref<2x3x1x128xf32, #tpu.memory_space<vmem>>, vector<1x1x1x128xf32>
    %113 = vector.shape_cast %112 : vector<1x1x1x128xf32> to vector<1x128xf32>
    %114 = vector.broadcast %113 : vector<1x128xf32> to vector<8x128xf32>
    %115 = arith.addf %111, %114 : vector<8x128xf32>
    %cst_86 = arith.constant 0.000000e+00 : f32
    %116 = vector.broadcast %cst_86 : f32 to vector<8x128xf32>
    %117 = arith.cmpf ogt, %115, %116 : vector<8x128xf32>
    %cst_87 = arith.constant 2.000000e-01 : f32
    %118 = vector.broadcast %cst_87 : f32 to vector<8x128xf32>
    %119 = arith.mulf %118, %115 : vector<8x128xf32>
    %120 = arith.select %117, %115, %119 : vector<8x128xi1>, vector<8x128xf32>
    %121 = arith.truncf %120 : vector<8x128xf32> to vector<8x128xbf16>
    %c1_88 = arith.constant 1 : index
    %c1_89 = arith.constant 1 : index
    %c0_90 = arith.constant 0 : index
    %c0_91 = arith.constant 0 : index
    %122 = vector.load %arg7[%c1_88, %c1_89, %c0_90, %c0_91] : memref<2x3x128x128xbf16, #tpu.memory_space<vmem>>, vector<1x1x128x128xbf16>
    %123 = vector.shape_cast %122 : vector<1x1x128x128xbf16> to vector<128x128xbf16>
    %cst_92 = arith.constant dense<0.000000e+00> : vector<8x128xf32>
    %124 = tpu.matmul %121, %123, %cst_92 {dimension_numbers = #tpu.dot_dimension_numbers<[1], [0], [0], [1], [0, 0, 1, 1], [], []>} : vector<8x128xbf16>, vector<128x128xbf16>, vector<8x128xf32> -> vector<8x128xf32>
    %c1_93 = arith.constant 1 : index
    %c1_94 = arith.constant 1 : index
    %c0_95 = arith.constant 0 : index
    %c0_96 = arith.constant 0 : index
    %125 = vector.load %arg8[%c1_93, %c1_94, %c0_95, %c0_96] : memref<2x3x1x128xf32, #tpu.memory_space<vmem>>, vector<1x1x1x128xf32>
    %126 = vector.shape_cast %125 : vector<1x1x1x128xf32> to vector<1x128xf32>
    %127 = vector.broadcast %126 : vector<1x128xf32> to vector<8x128xf32>
    %128 = arith.addf %124, %127 : vector<8x128xf32>
    %cst_97 = arith.constant 0.000000e+00 : f32
    %129 = vector.broadcast %cst_97 : f32 to vector<8x128xf32>
    %130 = arith.cmpf ogt, %128, %129 : vector<8x128xf32>
    %cst_98 = arith.constant 2.000000e-01 : f32
    %131 = vector.broadcast %cst_98 : f32 to vector<8x128xf32>
    %132 = arith.mulf %131, %128 : vector<8x128xf32>
    %133 = arith.select %130, %128, %132 : vector<8x128xi1>, vector<8x128xf32>
    %134 = arith.truncf %133 : vector<8x128xf32> to vector<8x128xbf16>
    %c1_99 = arith.constant 1 : index
    %c2_100 = arith.constant 2 : index
    %c0_101 = arith.constant 0 : index
    %c0_102 = arith.constant 0 : index
    %135 = vector.load %arg7[%c1_99, %c2_100, %c0_101, %c0_102] : memref<2x3x128x128xbf16, #tpu.memory_space<vmem>>, vector<1x1x128x128xbf16>
    %136 = vector.shape_cast %135 : vector<1x1x128x128xbf16> to vector<128x128xbf16>
    %cst_103 = arith.constant dense<0.000000e+00> : vector<8x128xf32>
    %137 = tpu.matmul %134, %136, %cst_103 {dimension_numbers = #tpu.dot_dimension_numbers<[1], [0], [0], [1], [0, 0, 1, 1], [], []>} : vector<8x128xbf16>, vector<128x128xbf16>, vector<8x128xf32> -> vector<8x128xf32>
    %c1_104 = arith.constant 1 : index
    %c2_105 = arith.constant 2 : index
    %c0_106 = arith.constant 0 : index
    %c0_107 = arith.constant 0 : index
    %138 = vector.load %arg8[%c1_104, %c2_105, %c0_106, %c0_107] : memref<2x3x1x128xf32, #tpu.memory_space<vmem>>, vector<1x1x1x128xf32>
    %139 = vector.shape_cast %138 : vector<1x1x1x128xf32> to vector<1x128xf32>
    %140 = vector.broadcast %139 : vector<1x128xf32> to vector<8x128xf32>
    %141 = arith.addf %137, %140 : vector<8x128xf32>
    %cst_108 = arith.constant 0.000000e+00 : f32
    %142 = vector.broadcast %cst_108 : f32 to vector<8x128xf32>
    %143 = arith.cmpf ogt, %141, %142 : vector<8x128xf32>
    %cst_109 = arith.constant 2.000000e-01 : f32
    %144 = vector.broadcast %cst_109 : f32 to vector<8x128xf32>
    %145 = arith.mulf %144, %141 : vector<8x128xf32>
    %146 = arith.select %143, %141, %145 : vector<8x128xi1>, vector<8x128xf32>
    %147 = arith.truncf %146 : vector<8x128xf32> to vector<8x128xbf16>
    %c1_110 = arith.constant 1 : index
    %c0_111 = arith.constant 0 : index
    %c0_112 = arith.constant 0 : index
    %148 = vector.load %arg9[%c1_110, %c0_111, %c0_112] : memref<2x128x128xbf16, #tpu.memory_space<vmem>>, vector<1x128x128xbf16>
    %149 = vector.shape_cast %148 : vector<1x128x128xbf16> to vector<128x128xbf16>
    %cst_113 = arith.constant dense<0.000000e+00> : vector<8x128xf32>
    %150 = tpu.matmul %147, %149, %cst_113 {dimension_numbers = #tpu.dot_dimension_numbers<[1], [0], [0], [1], [0, 0, 1, 1], [], []>} : vector<8x128xbf16>, vector<128x128xbf16>, vector<8x128xf32> -> vector<8x128xf32>
    %c1_114 = arith.constant 1 : index
    %c0_115 = arith.constant 0 : index
    %c0_116 = arith.constant 0 : index
    %151 = vector.load %arg10[%c1_114, %c0_115, %c0_116] : memref<2x1x128xf32, #tpu.memory_space<vmem>>, vector<1x1x128xf32>
    %152 = vector.shape_cast %151 : vector<1x1x128xf32> to vector<1x128xf32>
    %153 = vector.broadcast %152 : vector<1x128xf32> to vector<8x128xf32>
    %154 = arith.addf %150, %153 : vector<8x128xf32>
    %cst_117 = arith.constant 0.000000e+00 : f32
    %155 = vector.broadcast %cst_117 : f32 to vector<8x128xf32>
    %156 = arith.cmpf ogt, %154, %155 : vector<8x128xf32>
    %cst_118 = arith.constant 2.000000e-01 : f32
    %157 = vector.broadcast %cst_118 : f32 to vector<8x128xf32>
    %158 = arith.mulf %157, %154 : vector<8x128xf32>
    %159 = arith.select %156, %154, %158 : vector<8x128xi1>, vector<8x128xf32>
    %160 = vector.extract_strided_slice %50 {offsets = [0, 1], sizes = [8, 1], strides = [1, 1]} : vector<8x128xf32> to vector<8x1xf32>
    %161 = vector.broadcast %160 : vector<8x1xf32> to vector<8x128xf32>
    %162 = arith.mulf %161, %159 : vector<8x128xf32>
    %163 = arith.addf %107, %162 : vector<8x128xf32>
    %c0_119 = arith.constant 0 : index
    %c0_120 = arith.constant 0 : index
    %164 = vector.load %arg11[%c0_119, %c0_120] : memref<8x128xf32, #tpu.memory_space<vmem>>, vector<8x128xf32>
    tpu.vector_store %arg11[%c0_119, %c0_120], %163 {strides = array<i32>} : memref<8x128xf32, #tpu.memory_space<vmem>>, vector<8x128xf32>,
    return
  }
  func.func @transform_0(%arg0: i32) -> (i32, i32) {
    %c0_i32 = arith.constant 0 : i32
    %c0_i32_0 = arith.constant 0 : i32
    return %arg0, %c0_i32 : i32, i32
  }
  func.func @transform_1(%arg0: i32) -> (i32, i32) {
    %c0_i32 = arith.constant 0 : i32
    %c0_i32_0 = arith.constant 0 : i32
    return %arg0, %c0_i32 : i32, i32
  }
  func.func @transform_2(%arg0: i32) -> (i32, i32) {
    %c0_i32 = arith.constant 0 : i32
    %c0_i32_0 = arith.constant 0 : i32
    %c0_i32_1 = arith.constant 0 : i32
    return %c0_i32, %c0_i32_0 : i32, i32
  }
  func.func @transform_3(%arg0: i32) -> (i32, i32) {
    %c0_i32 = arith.constant 0 : i32
    %c0_i32_0 = arith.constant 0 : i32
    %c0_i32_1 = arith.constant 0 : i32
    return %c0_i32, %c0_i32_0 : i32, i32
  }
  func.func @transform_4(%arg0: i32) -> (i32, i32, i32) {
    %c0_i32 = arith.constant 0 : i32
    %c0_i32_0 = arith.constant 0 : i32
    %c0_i32_1 = arith.constant 0 : i32
    %c0_i32_2 = arith.constant 0 : i32
    return %c0_i32, %c0_i32_0, %c0_i32_1 : i32, i32, i32
  }
  func.func @transform_5(%arg0: i32) -> (i32, i32, i32) {
    %c0_i32 = arith.constant 0 : i32
    %c0_i32_0 = arith.constant 0 : i32
    %c0_i32_1 = arith.constant 0 : i32
    %c0_i32_2 = arith.constant 0 : i32
    return %c0_i32, %c0_i32_0, %c0_i32_1 : i32, i32, i32
  }
  func.func @transform_6(%arg0: i32) -> (i32, i32, i32, i32) {
    %c0_i32 = arith.constant 0 : i32
    %c0_i32_0 = arith.constant 0 : i32
    %c0_i32_1 = arith.constant 0 : i32
    %c0_i32_2 = arith.constant 0 : i32
    %c0_i32_3 = arith.constant 0 : i32
    return %c0_i32, %c0_i32_0, %c0_i32_1, %c0_i32_2 : i32, i32, i32, i32
  }
  func.func @transform_7(%arg0: i32) -> (i32, i32, i32, i32) {
    %c0_i32 = arith.constant 0 : i32
    %c0_i32_0 = arith.constant 0 : i32
    %c0_i32_1 = arith.constant 0 : i32
    %c0_i32_2 = arith.constant 0 : i32
    %c0_i32_3 = arith.constant 0 : i32
    return %c0_i32, %c0_i32_0, %c0_i32_1, %c0_i32_2 : i32, i32, i32, i32
  }
  func.func @transform_8(%arg0: i32) -> (i32, i32, i32) {
    %c0_i32 = arith.constant 0 : i32
    %c0_i32_0 = arith.constant 0 : i32
    %c0_i32_1 = arith.constant 0 : i32
    %c0_i32_2 = arith.constant 0 : i32
    return %c0_i32, %c0_i32_0, %c0_i32_1 : i32, i32, i32
  }
  func.func @transform_9(%arg0: i32) -> (i32, i32, i32) {
    %c0_i32 = arith.constant 0 : i32
    %c0_i32_0 = arith.constant 0 : i32
    %c0_i32_1 = arith.constant 0 : i32
    %c0_i32_2 = arith.constant 0 : i32
    return %c0_i32, %c0_i32_0, %c0_i32_1 : i32, i32, i32
  }
  func.func @transform_10(%arg0: i32) -> (i32, i32) {
    %c0_i32 = arith.constant 0 : i32
    %c0_i32_0 = arith.constant 0 : i32
    return %arg0, %c0_i32 : i32, i32
  }
}

</mosaic_0001>

<llo_original>
// kernel: mapping_network_pallas.1
$region0: #{mapping_network_pallas.1}
  #allocation0 [shape = 'u32[]', space=smem, size = 0x4, offset = 0x4, fixed_abs, tag = 'smem constant byte address 0x4 - core index']
  #allocation1 [shape = 'u32[144,128]{1,0:T(1,128)}', space=vmem, size = 0x12000, scoped, tag = 'internal scratch']
  %s0 = inlined_call_operand.vmem [shape: bf16[8,128], index: 0, kind: input, shape index: {}]
  %s1 = inlined_call_operand.vmem [shape: f32[8,128], index: 1, kind: input, shape index: {}]
  %s2 = inlined_call_operand.hbm [shape: bf16[128,128], index: 2, kind: input, shape index: {}]
  %s3 = inlined_call_operand.vmem [shape: f32[1,128], index: 3, kind: input, shape index: {}]
  %s4 = inlined_call_operand.hbm [shape: bf16[3,128,128], index: 4, kind: input, shape index: {}]
  %s5 = inlined_call_operand.vmem [shape: f32[3,1,128], index: 5, kind: input, shape index: {}]
  %s6 = inlined_call_operand.hbm [shape: bf16[2,3,128,128], index: 6, kind: input, shape index: {}]
  %s7 = inlined_call_operand.vmem [shape: f32[2,3,1,128], index: 7, kind: input, shape index: {}]
  %s8 = inlined_call_operand.hbm [shape: bf16[2,128,128], index: 8, kind: input, shape index: {}]
  %s9 = inlined_call_operand.vmem [shape: f32[2,1,128], index: 9, kind: input, shape index: {}]
  %s10 = inlined_call_operand.hbm [shape: f32[8,128], index: 10, kind: output, shape index: {}]
  %s11 = sld [smem:[#allocation0]]
  $region66: #{mapping_network_pallas.1} parent=0
    _
  %s13 = ssub.s32 1, %s11
  %s14 = scalar_select 0, %s13, %s11
  $region1: #{mapping_network_pallas.1} parent=0
    #allocation2 [shape = 'u8[32768]{0}', space=vmem, size = 0x8000, scoped, tag = 'input window, operand 2, single buffered']
    #allocation3 [shape = 's32[1]{0}', space=sflag, size = 0x4, scoped, tag = 'scoped memory for mapping_network_pallas.1']
    #allocation4 [shape = 's32[1]{0}', space=sflag, size = 0x4, scoped, tag = 'scoped memory for mapping_network_pallas.1']
    #allocation5 [shape = 'u8[98304]{0}', space=vmem, size = 0x18000, scoped, tag = 'input window, operand 4, single buffered']
    #allocation6 [shape = 's32[1]{0}', space=sflag, size = 0x4, scoped, tag = 'scoped memory for mapping_network_pallas.1']
    #allocation7 [shape = 'u8[196608]{0}', space=vmem, size = 0x30000, scoped, tag = 'input window, operand 6, single buffered']
    #allocation8 [shape = 'u8[65536]{0}', space=vmem, size = 0x10000, scoped, tag = 'input window, operand 8, single buffered']
    #allocation9 [shape = 's32[1]{0}', space=sflag, size = 0x4, scoped, tag = 'scoped memory for mapping_network_pallas.1']
    #allocation10 [shape = 'u8[4096]{0}', space=vmem, size = 0x1000, scoped, tag = 'output window, operand 0, single buffered']
    %15 = vsyncpa [#allocation3], 0
    %16 = vsyncpa [#allocation6], 0
    %17 = vsyncpa [#allocation9], 0
    %18 = vsyncpa [#allocation4], 0
    // Predicated region
    $region2: #{mapping_network_pallas.1} parent=1 // pred_check
      _
    $region3: #{mapping_network_pallas.1} parent=1 // pred_check_branch
      %20 = sbr.rel (0) target = $region5
    $region4: #{mapping_network_pallas.1} parent=1 // pred_region
      _
    $region5: #{mapping_network_pallas.1} parent=1 // pred_fallthru
      _
    // Predicated region
    $region6: #{mapping_network_pallas.1} parent=1 // pred_check
      _
    $region7: #{mapping_network_pallas.1} parent=1 // pred_check_branch
      %22 = sbr.rel (0) target = $region9
    $region8: #{mapping_network_pallas.1} parent=1 // pred_region
      _
    $region9: #{mapping_network_pallas.1} parent=1 // pred_fallthru
      _
    // Predicated region
    $region10: #{mapping_network_pallas.1} parent=1 // pred_check
      _
    $region11: #{mapping_network_pallas.1} parent=1 // pred_check_branch
      %24 = sbr.rel (0) target = $region13
    $region12: #{mapping_network_pallas.1} parent=1 // pred_region
      %s26 = ssub.s32 1024, 1024
      %27 = vsyncadd [#allocation3], %s26
      %s28 = sshll.u32 [#allocation2], 4
      %s29 = int_to_ptr.vmem [resolvable:$true] %s28
      %34 = dma.hbm_to_vmem [thread:$0]  %s2, 1024, %s29, [#allocation3], 64, 64, 4
    $region13: #{mapping_network_pallas.1} parent=1 // pred_fallthru
      _
    // Predicated region
    $region14: #{mapping_network_pallas.1} parent=1 // pred_check
      _
    $region15: #{mapping_network_pallas.1} parent=1 // pred_check_branch
      %36 = sbr.rel (0) target = $region17
    $region16: #{mapping_network_pallas.1} parent=1 // pred_region
      _
    $region17: #{mapping_network_pallas.1} parent=1 // pred_fallthru
      _
    // Predicated region
    $region18: #{mapping_network_pallas.1} parent=1 // pred_check
      _
    $region19: #{mapping_network_pallas.1} parent=1 // pred_check_branch
      %38 = sbr.rel (0) target = $region21
    $region20: #{mapping_network_pallas.1} parent=1 // pred_region
      %s40 = ssub.s32 3072, 3072
      %41 = vsyncadd [#allocation6], %s40
      %s42 = sshll.u32 [#allocation5], 4
      %s43 = int_to_ptr.vmem [resolvable:$true] %s42
      %48 = dma.hbm_to_vmem [thread:$0]  %s4, 3072, %s43, [#allocation6], 64, 64, 4
    $region21: #{mapping_network_pallas.1} parent=1 // pred_fallthru
      _
    // Predicated region
    $region22: #{mapping_network_pallas.1} parent=1 // pred_check
      _
    $region23: #{mapping_network_pallas.1} parent=1 // pred_check_branch
      %50 = sbr.rel (0) target = $region25
    $region24: #{mapping_network_pallas.1} parent=1 // pred_region
      _
    $region25: #{mapping_network_pallas.1} parent=1 // pred_fallthru
      _
    // Predicated region
    $region26: #{mapping_network_pallas.1} parent=1 // pred_check
      _
    $region27: #{mapping_network_pallas.1} parent=1 // pred_check_branch
      %52 = sbr.rel (0) target = $region29
    $region28: #{mapping_network_pallas.1} parent=1 // pred_region
      %s54 = ssub.s32 6144, 6144
      %55 = vsyncadd [#allocation6], %s54
      %s56 = sshll.u32 [#allocation7], 4
      %s57 = int_to_ptr.vmem [resolvable:$true] %s56
      %62 = dma.hbm_to_vmem [thread:$0]  %s6, 6144, %s57, [#allocation6], 64, 64, 4
    $region29: #{mapping_network_pallas.1} parent=1 // pred_fallthru
      _
    // Predicated region
    $region30: #{mapping_network_pallas.1} parent=1 // pred_check
      _
    $region31: #{mapping_network_pallas.1} parent=1 // pred_check_branch
      %64 = sbr.rel (0) target = $region33
    $region32: #{mapping_network_pallas.1} parent=1 // pred_region
      _
    $region33: #{mapping_network_pallas.1} parent=1 // pred_fallthru
      _
    // Predicated region
    $region34: #{mapping_network_pallas.1} parent=1 // pred_check
      _
    $region35: #{mapping_network_pallas.1} parent=1 // pred_check_branch
      %66 = sbr.rel (0) target = $region37
    $region36: #{mapping_network_pallas.1} parent=1 // pred_region
      %s68 = ssub.s32 2048, 2048
      %69 = vsyncadd [#allocation9], %s68
      %s70 = sshll.u32 [#allocation8], 4
      %s71 = int_to_ptr.vmem [resolvable:$true] %s70
      %76 = dma.hbm_to_vmem [thread:$0]  %s8, 2048, %s71, [#allocation9], 64, 64, 4
    $region37: #{mapping_network_pallas.1} parent=1 // pred_fallthru
      _
    // Predicated region
    $region38: #{mapping_network_pallas.1} parent=1 // pred_check
      _
    $region39: #{mapping_network_pallas.1} parent=1 // pred_check_branch
      %78 = sbr.rel (0) target = $region41
    $region40: #{mapping_network_pallas.1} parent=1 // pred_region
      _
    $region41: #{mapping_network_pallas.1} parent=1 // pred_fallthru
      _
    // Predicated region
    $region42: #{mapping_network_pallas.1} parent=1 // pred_check
      _
    $region43: #{mapping_network_pallas.1} parent=1 // pred_check_branch
      %80 = sbr.rel (0) target = $region45
    $region44: #{mapping_network_pallas.1} parent=1 // pred_region
      %81 = dma.done [#allocation3], 1024
    $region45: #{mapping_network_pallas.1} parent=1 // pred_fallthru
      _
    // Predicated region
    $region46: #{mapping_network_pallas.1} parent=1 // pred_check
      _
    $region47: #{mapping_network_pallas.1} parent=1 // pred_check_branch
      %83 = sbr.rel (0) target = $region49
    $region48: #{mapping_network_pallas.1} parent=1 // pred_region
      %84 = dma.done [#allocation6], 3072
    $region49: #{mapping_network_pallas.1} parent=1 // pred_fallthru
      _
    // Predicated region
    $region50: #{mapping_network_pallas.1} parent=1 // pred_check
      _
    $region51: #{mapping_network_pallas.1} parent=1 // pred_check_branch
      %86 = sbr.rel (0) target = $region53
    $region52: #{mapping_network_pallas.1} parent=1 // pred_region
      %87 = dma.done [#allocation6], 6144
    $region53: #{mapping_network_pallas.1} parent=1 // pred_fallthru
      _
    // Predicated region
    $region54: #{mapping_network_pallas.1} parent=1 // pred_check
      _
    $region55: #{mapping_network_pallas.1} parent=1 // pred_check_branch
      %89 = sbr.rel (0) target = $region57
    $region56: #{mapping_network_pallas.1} parent=1 // pred_region
      %90 = dma.done [#allocation9], 2048
    $region57: #{mapping_network_pallas.1} parent=1 // pred_fallthru
      _
    %v92 = vld [vmem:[%s0] sm:$0xf]
    %v93 = vld [vmem:[#allocation2] sm:$0xf]
    %v94 = vld [vmem:[#allocation2 + $0x4] sm:$0xf]
    %v95 = vld [vmem:[#allocation2 + $0x8] sm:$0xf]
    %v96 = vld [vmem:[#allocation2 + $0xc] sm:$0xf]
    %v97 = vld [vmem:[#allocation2 + $0x10] sm:$0xf]
    %v98 = vld [vmem:[#allocation2 + $0x14] sm:$0xf]
    %v99 = vld [vmem:[#allocation2 + $0x18] sm:$0xf]
    %v100 = vld [vmem:[#allocation2 + $0x1c] sm:$0xf]
    %v101 = vld [vmem:[#allocation2 + $0x20] sm:$0xf]
    %v102 = vld [vmem:[#allocation2 + $0x24] sm:$0xf]
    %v103 = vld [vmem:[#allocation2 + $0x28] sm:$0xf]
    %v104 = vld [vmem:[#allocation2 + $0x2c] sm:$0xf]
    %v105 = vld [vmem:[#allocation2 + $0x30] sm:$0xf]
    %v106 = vld [vmem:[#allocation2 + $0x34] sm:$0xf]
    %v107 = vld [vmem:[#allocation2 + $0x38] sm:$0xf]
    %v108 = vld [vmem:[#allocation2 + $0x3c] sm:$0xf]
    %v109 = vld [vmem:[%s3] sm:$0x1]
    %v111 = vlaneseq
    %v112 = vshrl.u32 %v111, 7
    %v113 = vsub.s32 0, %v112
    %v114 = vrot.slane %v109, %v113
    %v132 = vunpack.c.l.b16 %v93
    %v133 = vunpack.c.l.b16 %v94
    %v134 = vunpack.c.l.b16 %v95
    %v135 = vunpack.c.l.b16 %v96
    %v136 = vunpack.c.l.b16 %v97
    %v137 = vunpack.c.l.b16 %v98
    %v138 = vunpack.c.l.b16 %v99
    %v139 = vunpack.c.l.b16 %v100
    %v140 = vunpack.c.l.b16 %v101
    %v141 = vunpack.c.l.b16 %v102
    %v142 = vunpack.c.l.b16 %v103
    %v143 = vunpack.c.l.b16 %v104
    %v144 = vunpack.c.l.b16 %v105
    %v145 = vunpack.c.l.b16 %v106
    %v146 = vunpack.c.l.b16 %v107
    %v147 = vunpack.c.l.b16 %v108
    %v148 = vpack.c.b16 %v133, %v132
    %v149 = vpack.c.b16 %v135, %v134
    %v150 = vpack.c.b16 %v137, %v136
    %v151 = vpack.c.b16 %v139, %v138
    %v152 = vpack.c.b16 %v141, %v140
    %v153 = vpack.c.b16 %v143, %v142
    %v154 = vpack.c.b16 %v145, %v144
    %v155 = vpack.c.b16 %v147, %v146
    %164 = vmatprep.subr.bf16.mxu0 0
    %165 = vmatpush1.bf16.msra.mxu0 %v155
    %166 = vmatprep.subr.bf16.mxu0 0
    %167 = vmatpush1.bf16.msra.mxu0 %v154
    %168 = vmatprep.subr.bf16.mxu0 0
    %169 = vmatpush1.bf16.msra.mxu0 %v153
    %170 = vmatprep.subr.bf16.mxu0 0
    %171 = vmatpush1.bf16.msra.mxu0 %v152
    %172 = vmatprep.subr.bf16.mxu0 0
    %173 = vmatpush1.bf16.msra.mxu0 %v151
    %174 = vmatprep.subr.bf16.mxu0 0
    %175 = vmatpush1.bf16.msra.mxu0 %v150
    %176 = vmatprep.subr.bf16.mxu0 0
    %177 = vmatpush1.bf16.msra.mxu0 %v149
    %178 = vmatprep.subr.bf16.mxu0 0
    %179 = vmatpush1.bf16.msra.mxu0 %v148
    %180 = vmatprep.subr.bf16.mxu0 0
    %181 = vmatpush2.bf16.msra.mxu0 0
    %182 = vmatprep.subr.bf16.mxu0 0
    %183 = vmatpush2.bf16.msra.mxu0 0
    %184 = vmatprep.subr.bf16.mxu0 0
    %185 = vmatpush2.bf16.msra.mxu0 0
    %186 = vmatprep.subr.bf16.mxu0 0
    %187 = vmatpush2.bf16.msra.mxu0 0
    %188 = vmatprep.subr.bf16.mxu0 0
    %189 = vmatpush2.bf16.msra.mxu0 0
    %190 = vmatprep.subr.bf16.mxu0 0
    %191 = vmatpush2.bf16.msra.mxu0 0
    %192 = vmatprep.subr.bf16.mxu0 0
    %193 = vmatpush2.bf16.msra.mxu0 0
    %194 = vmatprep.subr.bf16.mxu0 0
    %195 = vmatpush2.bf16.msra.mxu0 0
    %196 = vmatprep.mubr.bf16.mxu0 0
    %197 = vmatmul.mubr.bf16.gmra.mxu0 %v92
    %v198 = vpop.f32.mrf.mxu0
    %v199 = vadd.f32 %v114, %v198
    %v200 = vpop.f32.mrf.mxu0
    %v201 = vpop.f32.mrf.mxu0
    %v202 = vpop.f32.mrf.mxu0
    %203 = vdwg.mxu0
    %vm204 = vcmp.gt.f32.partialorder %v199, 0.0
    %v205 = vmul.f32 %v199, 0.2
    %v206 = vsel %vm204, %v199, %v205
    %v207 = vpack.c.bf16 %v206, %v206
    %v208 = vld [vmem:[#allocation5] sm:$0xf]
    %v209 = vld [vmem:[#allocation5 + $0x4] sm:$0xf]
    %v210 = vld [vmem:[#allocation5 + $0x8] sm:$0xf]
    %v211 = vld [vmem:[#allocation5 + $0xc] sm:$0xf]
    %v212 = vld [vmem:[#allocation5 + $0x10] sm:$0xf]
    %v213 = vld [vmem:[#allocation5 + $0x14] sm:$0xf]
    %v214 = vld [vmem:[#allocation5 + $0x18] sm:$0xf]
    %v215 = vld [vmem:[#allocation5 + $0x1c] sm:$0xf]
    %v216 = vld [vmem:[#allocation5 + $0x20] sm:$0xf]
    %v217 = vld [vmem:[#allocation5 + $0x24] sm:$0xf]
    %v218 = vld [vmem:[#allocation5 + $0x28] sm:$0xf]
    %v219 = vld [vmem:[#allocation5 + $0x2c] sm:$0xf]
    %v220 = vld [vmem:[#allocation5 + $0x30] sm:$0xf]
    %v221 = vld [vmem:[#allocation5 + $0x34] sm:$0xf]
    %v222 = vld [vmem:[#allocation5 + $0x38] sm:$0xf]
    %v223 = vld [vmem:[#allocation5 + $0x3c] sm:$0xf]
    %v224 = vld [vmem:[%s5] sm:$0x1]
    %v226 = vlaneseq
    %v227 = vshrl.u32 %v226, 7
    %v228 = vsub.s32 0, %v227
    %v229 = vrot.slane %v224, %v228
    %v247 = vunpack.c.l.b16 %v208
    %v248 = vunpack.c.l.b16 %v209
    %v249 = vunpack.c.l.b16 %v210
    %v250 = vunpack.c.l.b16 %v211
    %v251 = vunpack.c.l.b16 %v212
    %v252 = vunpack.c.l.b16 %v213
    %v253 = vunpack.c.l.b16 %v214
    %v254 = vunpack.c.l.b16 %v215
    %v255 = vunpack.c.l.b16 %v216
    %v256 = vunpack.c.l.b16 %v217
    %v257 = vunpack.c.l.b16 %v218
    %v258 = vunpack.c.l.b16 %v219
    %v259 = vunpack.c.l.b16 %v220
    %v260 = vunpack.c.l.b16 %v221
    %v261 = vunpack.c.l.b16 %v222
    %v262 = vunpack.c.l.b16 %v223
    %v263 = vpack.c.b16 %v248, %v247
    %v264 = vpack.c.b16 %v250, %v249
    %v265 = vpack.c.b16 %v252, %v251
    %v266 = vpack.c.b16 %v254, %v253
    %v267 = vpack.c.b16 %v256, %v255
    %v268 = vpack.c.b16 %v258, %v257
    %v269 = vpack.c.b16 %v260, %v259
    %v270 = vpack.c.b16 %v262, %v261
    %279 = vmatprep.subr.bf16.mxu0 0
    %280 = vmatpush1.bf16.msra.mxu0 %v270
    %281 = vmatprep.subr.bf16.mxu0 0
    %282 = vmatpush1.bf16.msra.mxu0 %v269
    %283 = vmatprep.subr.bf16.mxu0 0
    %284 = vmatpush1.bf16.msra.mxu0 %v268
    %285 = vmatprep.subr.bf16.mxu0 0
    %286 = vmatpush1.bf16.msra.mxu0 %v267
    %287 = vmatprep.subr.bf16.mxu0 0
    %288 = vmatpush1.bf16.msra.mxu0 %v266
    %289 = vmatprep.subr.bf16.mxu0 0
    %290 = vmatpush1.bf16.msra.mxu0 %v265
    %291 = vmatprep.subr.bf16.mxu0 0
    %292 = vmatpush1.bf16.msra.mxu0 %v264
    %293 = vmatprep.subr.bf16.mxu0 0
    %294 = vmatpush1.bf16.msra.mxu0 %v263
    %295 = vmatprep.subr.bf16.mxu0 0
    %296 = vmatpush2.bf16.msra.mxu0 0
    %297 = vmatprep.subr.bf16.mxu0 0
    %298 = vmatpush2.bf16.msra.mxu0 0
    %299 = vmatprep.subr.bf16.mxu0 0
    %300 = vmatpush2.bf16.msra.mxu0 0
    %301 = vmatprep.subr.bf16.mxu0 0
    %302 = vmatpush2.bf16.msra.mxu0 0
    %303 = vmatprep.subr.bf16.mxu0 0
    %304 = vmatpush2.bf16.msra.mxu0 0
    %305 = vmatprep.subr.bf16.mxu0 0
    %306 = vmatpush2.bf16.msra.mxu0 0
    %307 = vmatprep.subr.bf16.mxu0 0
    %308 = vmatpush2.bf16.msra.mxu0 0
    %309 = vmatprep.subr.bf16.mxu0 0
    %310 = vmatpush2.bf16.msra.mxu0 0
    %311 = vmatprep.mubr.bf16.mxu0 0
    %312 = vmatmul.mubr.bf16.gmra.mxu0 %v207
    %v313 = vpop.f32.mrf.mxu0
    %v314 = vadd.f32 %v229, %v313
    %v315 = vpop.f32.mrf.mxu0
    %v316 = vpop.f32.mrf.mxu0
    %v317 = vpop.f32.mrf.mxu0
    %318 = vdwg.mxu0
    %vm319 = vcmp.gt.f32.partialorder %v314, 0.0
    %v320 = vmul.f32 %v314, 0.2
    %v321 = vsel %vm319, %v314, %v320
    %v322 = vpack.c.bf16 %v321, %v321
    %s323 = scalar_lea.vmem [#allocation5], 64
    %v324 = vld [vmem:[%s323] sm:$0xf]
    %v325 = vld [vmem:[%s323 + $0x4] sm:$0xf]
    %v326 = vld [vmem:[%s323 + $0x8] sm:$0xf]
    %v327 = vld [vmem:[%s323 + $0xc] sm:$0xf]
    %v328 = vld [vmem:[%s323 + $0x10] sm:$0xf]
    %v329 = vld [vmem:[%s323 + $0x14] sm:$0xf]
    %v330 = vld [vmem:[%s323 + $0x18] sm:$0xf]
    %v331 = vld [vmem:[%s323 + $0x1c] sm:$0xf]
    %v332 = vld [vmem:[%s323 + $0x20] sm:$0xf]
    %v333 = vld [vmem:[%s323 + $0x24] sm:$0xf]
    %v334 = vld [vmem:[%s323 + $0x28] sm:$0xf]
    %v335 = vld [vmem:[%s323 + $0x2c] sm:$0xf]
    %v336 = vld [vmem:[%s323 + $0x30] sm:$0xf]
    %v337 = vld [vmem:[%s323 + $0x34] sm:$0xf]
    %v338 = vld [vmem:[%s323 + $0x38] sm:$0xf]
    %v339 = vld [vmem:[%s323 + $0x3c] sm:$0xf]
    %s340 = scalar_lea.vmem %s5, 1
    %v341 = vld [vmem:[%s340] sm:$0x1]
    %v343 = vlaneseq
    %v344 = vshrl.u32 %v343, 7
    %v345 = vsub.s32 0, %v344
    %v346 = vrot.slane %v341, %v345
    %v364 = vunpack.c.l.b16 %v324
    %v365 = vunpack.c.l.b16 %v325
    %v366 = vunpack.c.l.b16 %v326
    %v367 = vunpack.c.l.b16 %v327
    %v368 = vunpack.c.l.b16 %v328
    %v369 = vunpack.c.l.b16 %v329
    %v370 = vunpack.c.l.b16 %v330
    %v371 = vunpack.c.l.b16 %v331
    %v372 = vunpack.c.l.b16 %v332
    %v373 = vunpack.c.l.b16 %v333
    %v374 = vunpack.c.l.b16 %v334
    %v375 = vunpack.c.l.b16 %v335
    %v376 = vunpack.c.l.b16 %v336
    %v377 = vunpack.c.l.b16 %v337
    %v378 = vunpack.c.l.b16 %v338
    %v379 = vunpack.c.l.b16 %v339
    %v380 = vpack.c.b16 %v365, %v364
    %v381 = vpack.c.b16 %v367, %v366
    %v382 = vpack.c.b16 %v369, %v368
    %v383 = vpack.c.b16 %v371, %v370
    %v384 = vpack.c.b16 %v373, %v372
    %v385 = vpack.c.b16 %v375, %v374
    %v386 = vpack.c.b16 %v377, %v376
    %v387 = vpack.c.b16 %v379, %v378
    %396 = vmatprep.subr.bf16.mxu0 0
    %397 = vmatpush1.bf16.msra.mxu0 %v387
    %398 = vmatprep.subr.bf16.mxu0 0
    %399 = vmatpush1.bf16.msra.mxu0 %v386
    %400 = vmatprep.subr.bf16.mxu0 0
    %401 = vmatpush1.bf16.msra.mxu0 %v385
    %402 = vmatprep.subr.bf16.mxu0 0
    %403 = vmatpush1.bf16.msra.mxu0 %v384
    %404 = vmatprep.subr.bf16.mxu0 0
    %405 = vmatpush1.bf16.msra.mxu0 %v383
    %406 = vmatprep.subr.bf16.mxu0 0
    %407 = vmatpush1.bf16.msra.mxu0 %v382
    %408 = vmatprep.subr.bf16.mxu0 0
    %409 = vmatpush1.bf16.msra.mxu0 %v381
    %410 = vmatprep.subr.bf16.mxu0 0
    %411 = vmatpush1.bf16.msra.mxu0 %v380
    %412 = vmatprep.subr.bf16.mxu0 0
    %413 = vmatpush2.bf16.msra.mxu0 0
    %414 = vmatprep.subr.bf16.mxu0 0
    %415 = vmatpush2.bf16.msra.mxu0 0
    %416 = vmatprep.subr.bf16.mxu0 0
    %417 = vmatpush2.bf16.msra.mxu0 0
    %418 = vmatprep.subr.bf16.mxu0 0
    %419 = vmatpush2.bf16.msra.mxu0 0
    %420 = vmatprep.subr.bf16.mxu0 0
    %421 = vmatpush2.bf16.msra.mxu0 0
    %422 = vmatprep.subr.bf16.mxu0 0
    %423 = vmatpush2.bf16.msra.mxu0 0
    %424 = vmatprep.subr.bf16.mxu0 0
    %425 = vmatpush2.bf16.msra.mxu0 0
    %426 = vmatprep.subr.bf16.mxu0 0
    %427 = vmatpush2.bf16.msra.mxu0 0
    %428 = vmatprep.mubr.bf16.mxu0 0
    %429 = vmatmul.mubr.bf16.gmra.mxu0 %v322
    %v430 = vpop.f32.mrf.mxu0
    %v431 = vadd.f32 %v346, %v430
    %v432 = vpop.f32.mrf.mxu0
    %v433 = vpop.f32.mrf.mxu0
    %v434 = vpop.f32.mrf.mxu0
    %435 = vdwg.mxu0
    %vm436 = vcmp.gt.f32.partialorder %v431, 0.0
    %v437 = vmul.f32 %v431, 0.2
    %v438 = vsel %vm436, %v431, %v437
    %v439 = vpack.c.bf16 %v438, %v438
    %s440 = scalar_lea.vmem [#allocation5], 128
    %v441 = vld [vmem:[%s440] sm:$0xf]
    %v442 = vld [vmem:[%s440 + $0x4] sm:$0xf]
    %v443 = vld [vmem:[%s440 + $0x8] sm:$0xf]
    %v444 = vld [vmem:[%s440 + $0xc] sm:$0xf]
    %v445 = vld [vmem:[%s440 + $0x10] sm:$0xf]
    %v446 = vld [vmem:[%s440 + $0x14] sm:$0xf]
    %v447 = vld [vmem:[%s440 + $0x18] sm:$0xf]
    %v448 = vld [vmem:[%s440 + $0x1c] sm:$0xf]
    %v449 = vld [vmem:[%s440 + $0x20] sm:$0xf]
    %v450 = vld [vmem:[%s440 + $0x24] sm:$0xf]
    %v451 = vld [vmem:[%s440 + $0x28] sm:$0xf]
    %v452 = vld [vmem:[%s440 + $0x2c] sm:$0xf]
    %v453 = vld [vmem:[%s440 + $0x30] sm:$0xf]
    %v454 = vld [vmem:[%s440 + $0x34] sm:$0xf]
    %v455 = vld [vmem:[%s440 + $0x38] sm:$0xf]
    %v456 = vld [vmem:[%s440 + $0x3c] sm:$0xf]
    %s457 = scalar_lea.vmem %s5, 2
    %v458 = vld [vmem:[%s457] sm:$0x1]
    %v460 = vlaneseq
    %v461 = vshrl.u32 %v460, 7
    %v462 = vsub.s32 0, %v461
    %v463 = vrot.slane %v458, %v462
    %v481 = vunpack.c.l.b16 %v441
    %v482 = vunpack.c.l.b16 %v442
    %v483 = vunpack.c.l.b16 %v443
    %v484 = vunpack.c.l.b16 %v444
    %v485 = vunpack.c.l.b16 %v445
    %v486 = vunpack.c.l.b16 %v446
    %v487 = vunpack.c.l.b16 %v447
    %v488 = vunpack.c.l.b16 %v448
    %v489 = vunpack.c.l.b16 %v449
    %v490 = vunpack.c.l.b16 %v450
    %v491 = vunpack.c.l.b16 %v451
    %v492 = vunpack.c.l.b16 %v452
    %v493 = vunpack.c.l.b16 %v453
    %v494 = vunpack.c.l.b16 %v454
    %v495 = vunpack.c.l.b16 %v455
    %v496 = vunpack.c.l.b16 %v456
    %v497 = vpack.c.b16 %v482, %v481
    %v498 = vpack.c.b16 %v484, %v483
    %v499 = vpack.c.b16 %v486, %v485
    %v500 = vpack.c.b16 %v488, %v487
    %v501 = vpack.c.b16 %v490, %v489
    %v502 = vpack.c.b16 %v492, %v491
    %v503 = vpack.c.b16 %v494, %v493
    %v504 = vpack.c.b16 %v496, %v495
    %513 = vmatprep.subr.bf16.mxu0 0
    %514 = vmatpush1.bf16.msra.mxu0 %v504
    %515 = vmatprep.subr.bf16.mxu0 0
    %516 = vmatpush1.bf16.msra.mxu0 %v503
    %517 = vmatprep.subr.bf16.mxu0 0
    %518 = vmatpush1.bf16.msra.mxu0 %v502
    %519 = vmatprep.subr.bf16.mxu0 0
    %520 = vmatpush1.bf16.msra.mxu0 %v501
    %521 = vmatprep.subr.bf16.mxu0 0
    %522 = vmatpush1.bf16.msra.mxu0 %v500
    %523 = vmatprep.subr.bf16.mxu0 0
    %524 = vmatpush1.bf16.msra.mxu0 %v499
    %525 = vmatprep.subr.bf16.mxu0 0
    %526 = vmatpush1.bf16.msra.mxu0 %v498
    %527 = vmatprep.subr.bf16.mxu0 0
    %528 = vmatpush1.bf16.msra.mxu0 %v497
    %529 = vmatprep.subr.bf16.mxu0 0
    %530 = vmatpush2.bf16.msra.mxu0 0
    %531 = vmatprep.subr.bf16.mxu0 0
    %532 = vmatpush2.bf16.msra.mxu0 0
    %533 = vmatprep.subr.bf16.mxu0 0
    %534 = vmatpush2.bf16.msra.mxu0 0
    %535 = vmatprep.subr.bf16.mxu0 0
    %536 = vmatpush2.bf16.msra.mxu0 0
    %537 = vmatprep.subr.bf16.mxu0 0
    %538 = vmatpush2.bf16.msra.mxu0 0
    %539 = vmatprep.subr.bf16.mxu0 0
    %540 = vmatpush2.bf16.msra.mxu0 0
    %541 = vmatprep.subr.bf16.mxu0 0
    %542 = vmatpush2.bf16.msra.mxu0 0
    %543 = vmatprep.subr.bf16.mxu0 0
    %544 = vmatpush2.bf16.msra.mxu0 0
    %545 = vmatprep.mubr.bf16.mxu0 0
    %546 = vmatmul.mubr.bf16.gmra.mxu0 %v439
    %v547 = vpop.f32.mrf.mxu0
    %v548 = vadd.f32 %v463, %v547
    %v549 = vpop.f32.mrf.mxu0
    %v550 = vpop.f32.mrf.mxu0
    %v551 = vpop.f32.mrf.mxu0
    %552 = vdwg.mxu0
    %vm553 = vcmp.gt.f32.partialorder %v548, 0.0
    %v554 = vmul.f32 %v548, 0.2
    %v555 = vsel %vm553, %v548, %v554
    %v556 = vld [vmem:[%s1] sm:$0xff]
    %v557 = vpack.c.bf16 %v555, %v555
    %v558 = vld [vmem:[#allocation7] sm:$0xf]
    %v559 = vld [vmem:[#allocation7 + $0x4] sm:$0xf]
    %v560 = vld [vmem:[#allocation7 + $0x8] sm:$0xf]
    %v561 = vld [vmem:[#allocation7 + $0xc] sm:$0xf]
    %v562 = vld [vmem:[#allocation7 + $0x10] sm:$0xf]
    %v563 = vld [vmem:[#allocation7 + $0x14] sm:$0xf]
    %v564 = vld [vmem:[#allocation7 + $0x18] sm:$0xf]
    %v565 = vld [vmem:[#allocation7 + $0x1c] sm:$0xf]
    %v566 = vld [vmem:[#allocation7 + $0x20] sm:$0xf]
    %v567 = vld [vmem:[#allocation7 + $0x24] sm:$0xf]
    %v568 = vld [vmem:[#allocation7 + $0x28] sm:$0xf]
    %v569 = vld [vmem:[#allocation7 + $0x2c] sm:$0xf]
    %v570 = vld [vmem:[#allocation7 + $0x30] sm:$0xf]
    %v571 = vld [vmem:[#allocation7 + $0x34] sm:$0xf]
    %v572 = vld [vmem:[#allocation7 + $0x38] sm:$0xf]
    %v573 = vld [vmem:[#allocation7 + $0x3c] sm:$0xf]
    %v574 = vld [vmem:[%s7] sm:$0x1]
    %v576 = vlaneseq
    %v577 = vshrl.u32 %v576, 7
    %v578 = vsub.s32 0, %v577
    %v579 = vrot.slane %v574, %v578
    %v597 = vunpack.c.l.b16 %v558
    %v598 = vunpack.c.l.b16 %v559
    %v599 = vunpack.c.l.b16 %v560
    %v600 = vunpack.c.l.b16 %v561
    %v601 = vunpack.c.l.b16 %v562
    %v602 = vunpack.c.l.b16 %v563
    %v603 = vunpack.c.l.b16 %v564
    %v604 = vunpack.c.l.b16 %v565
    %v605 = vunpack.c.l.b16 %v566
    %v606 = vunpack.c.l.b16 %v567
    %v607 = vunpack.c.l.b16 %v568
    %v608 = vunpack.c.l.b16 %v569
    %v609 = vunpack.c.l.b16 %v570
    %v610 = vunpack.c.l.b16 %v571
    %v611 = vunpack.c.l.b16 %v572
    %v612 = vunpack.c.l.b16 %v573
    %v613 = vpack.c.b16 %v598, %v597
    %v614 = vpack.c.b16 %v600, %v599
    %v615 = vpack.c.b16 %v602, %v601
    %v616 = vpack.c.b16 %v604, %v603
    %v617 = vpack.c.b16 %v606, %v605
    %v618 = vpack.c.b16 %v608, %v607
    %v619 = vpack.c.b16 %v610, %v609
    %v620 = vpack.c.b16 %v612, %v611
    %629 = vmatprep.subr.bf16.mxu0 0
    %630 = vmatpush1.bf16.msra.mxu0 %v620
    %631 = vmatprep.subr.bf16.mxu0 0
    %632 = vmatpush1.bf16.msra.mxu0 %v619
    %633 = vmatprep.subr.bf16.mxu0 0
    %634 = vmatpush1.bf16.msra.mxu0 %v618
    %635 = vmatprep.subr.bf16.mxu0 0
    %636 = vmatpush1.bf16.msra.mxu0 %v617
    %637 = vmatprep.subr.bf16.mxu0 0
    %638 = vmatpush1.bf16.msra.mxu0 %v616
    %639 = vmatprep.subr.bf16.mxu0 0
    %640 = vmatpush1.bf16.msra.mxu0 %v615
    %641 = vmatprep.subr.bf16.mxu0 0
    %642 = vmatpush1.bf16.msra.mxu0 %v614
    %643 = vmatprep.subr.bf16.mxu0 0
    %644 = vmatpush1.bf16.msra.mxu0 %v613
    %645 = vmatprep.subr.bf16.mxu0 0
    %646 = vmatpush2.bf16.msra.mxu0 0
    %647 = vmatprep.subr.bf16.mxu0 0
    %648 = vmatpush2.bf16.msra.mxu0 0
    %649 = vmatprep.subr.bf16.mxu0 0
    %650 = vmatpush2.bf16.msra.mxu0 0
    %651 = vmatprep.subr.bf16.mxu0 0
    %652 = vmatpush2.bf16.msra.mxu0 0
    %653 = vmatprep.subr.bf16.mxu0 0
    %654 = vmatpush2.bf16.msra.mxu0 0
    %655 = vmatprep.subr.bf16.mxu0 0
    %656 = vmatpush2.bf16.msra.mxu0 0
    %657 = vmatprep.subr.bf16.mxu0 0
    %658 = vmatpush2.bf16.msra.mxu0 0
    %659 = vmatprep.subr.bf16.mxu0 0
    %660 = vmatpush2.bf16.msra.mxu0 0
    %661 = vmatprep.mubr.bf16.mxu0 0
    %662 = vmatmul.mubr.bf16.gmra.mxu0 %v557
    %v663 = vpop.f32.mrf.mxu0
    %v664 = vadd.f32 %v579, %v663
    %v665 = vpop.f32.mrf.mxu0
    %v666 = vpop.f32.mrf.mxu0
    %v667 = vpop.f32.mrf.mxu0
    %668 = vdwg.mxu0
    %vm669 = vcmp.gt.f32.partialorder %v664, 0.0
    %v670 = vmul.f32 %v664, 0.2
    %v671 = vsel %vm669, %v664, %v670
    %v672 = vpack.c.bf16 %v671, %v671
    %s673 = scalar_lea.vmem [#allocation7], 64
    %v674 = vld [vmem:[%s673] sm:$0xf]
    %v675 = vld [vmem:[%s673 + $0x4] sm:$0xf]
    %v676 = vld [vmem:[%s673 + $0x8] sm:$0xf]
    %v677 = vld [vmem:[%s673 + $0xc] sm:$0xf]
    %v678 = vld [vmem:[%s673 + $0x10] sm:$0xf]
    %v679 = vld [vmem:[%s673 + $0x14] sm:$0xf]
    %v680 = vld [vmem:[%s673 + $0x18] sm:$0xf]
    %v681 = vld [vmem:[%s673 + $0x1c] sm:$0xf]
    %v682 = vld [vmem:[%s673 + $0x20] sm:$0xf]
    %v683 = vld [vmem:[%s673 + $0x24] sm:$0xf]
    %v684 = vld [vmem:[%s673 + $0x28] sm:$0xf]
    %v685 = vld [vmem:[%s673 + $0x2c] sm:$0xf]
    %v686 = vld [vmem:[%s673 + $0x30] sm:$0xf]
    %v687 = vld [vmem:[%s673 + $0x34] sm:$0xf]
    %v688 = vld [vmem:[%s673 + $0x38] sm:$0xf]
    %v689 = vld [vmem:[%s673 + $0x3c] sm:$0xf]
    %s690 = scalar_lea.vmem %s7, 1
    %v691 = vld [vmem:[%s690] sm:$0x1]
    %v693 = vlaneseq
    %v694 = vshrl.u32 %v693, 7
    %v695 = vsub.s32 0, %v694
    %v696 = vrot.slane %v691, %v695
    %v714 = vunpack.c.l.b16 %v674
    %v715 = vunpack.c.l.b16 %v675
    %v716 = vunpack.c.l.b16 %v676
    %v717 = vunpack.c.l.b16 %v677
    %v718 = vunpack.c.l.b16 %v678
    %v719 = vunpack.c.l.b16 %v679
    %v720 = vunpack.c.l.b16 %v680
    %v721 = vunpack.c.l.b16 %v681
    %v722 = vunpack.c.l.b16 %v682
    %v723 = vunpack.c.l.b16 %v683
    %v724 = vunpack.c.l.b16 %v684
    %v725 = vunpack.c.l.b16 %v685
    %v726 = vunpack.c.l.b16 %v686
    %v727 = vunpack.c.l.b16 %v687
    %v728 = vunpack.c.l.b16 %v688
    %v729 = vunpack.c.l.b16 %v689
    %v730 = vpack.c.b16 %v715, %v714
    %v731 = vpack.c.b16 %v717, %v716
    %v732 = vpack.c.b16 %v719, %v718
    %v733 = vpack.c.b16 %v721, %v720
    %v734 = vpack.c.b16 %v723, %v722
    %v735 = vpack.c.b16 %v725, %v724
    %v736 = vpack.c.b16 %v727, %v726
    %v737 = vpack.c.b16 %v729, %v728
    %746 = vmatprep.subr.bf16.mxu0 0
    %747 = vmatpush1.bf16.msra.mxu0 %v737
    %748 = vmatprep.subr.bf16.mxu0 0
    %749 = vmatpush1.bf16.msra.mxu0 %v736
    %750 = vmatprep.subr.bf16.mxu0 0
    %751 = vmatpush1.bf16.msra.mxu0 %v735
    %752 = vmatprep.subr.bf16.mxu0 0
    %753 = vmatpush1.bf16.msra.mxu0 %v734
    %754 = vmatprep.subr.bf16.mxu0 0
    %755 = vmatpush1.bf16.msra.mxu0 %v733
    %756 = vmatprep.subr.bf16.mxu0 0
    %757 = vmatpush1.bf16.msra.mxu0 %v732
    %758 = vmatprep.subr.bf16.mxu0 0
    %759 = vmatpush1.bf16.msra.mxu0 %v731
    %760 = vmatprep.subr.bf16.mxu0 0
    %761 = vmatpush1.bf16.msra.mxu0 %v730
    %762 = vmatprep.subr.bf16.mxu0 0
    %763 = vmatpush2.bf16.msra.mxu0 0
    %764 = vmatprep.subr.bf16.mxu0 0
    %765 = vmatpush2.bf16.msra.mxu0 0
    %766 = vmatprep.subr.bf16.mxu0 0
    %767 = vmatpush2.bf16.msra.mxu0 0
    %768 = vmatprep.subr.bf16.mxu0 0
    %769 = vmatpush2.bf16.msra.mxu0 0
    %770 = vmatprep.subr.bf16.mxu0 0
    %771 = vmatpush2.bf16.msra.mxu0 0
    %772 = vmatprep.subr.bf16.mxu0 0
    %773 = vmatpush2.bf16.msra.mxu0 0
    %774 = vmatprep.subr.bf16.mxu0 0
    %775 = vmatpush2.bf16.msra.mxu0 0
    %776 = vmatprep.subr.bf16.mxu0 0
    %777 = vmatpush2.bf16.msra.mxu0 0
    %778 = vmatprep.mubr.bf16.mxu0 0
    %779 = vmatmul.mubr.bf16.gmra.mxu0 %v672
    %v780 = vpop.f32.mrf.mxu0
    %v781 = vadd.f32 %v696, %v780
    %v782 = vpop.f32.mrf.mxu0
    %v783 = vpop.f32.mrf.mxu0
    %v784 = vpop.f32.mrf.mxu0
    %785 = vdwg.mxu0
    %vm786 = vcmp.gt.f32.partialorder %v781, 0.0
    %v787 = vmul.f32 %v781, 0.2
    %v788 = vsel %vm786, %v781, %v787
    %v789 = vpack.c.bf16 %v788, %v788
    %s790 = scalar_lea.vmem [#allocation7], 128
    %v791 = vld [vmem:[%s790] sm:$0xf]
    %v792 = vld [vmem:[%s790 + $0x4] sm:$0xf]
    %v793 = vld [vmem:[%s790 + $0x8] sm:$0xf]
    %v794 = vld [vmem:[%s790 + $0xc] sm:$0xf]
    %v795 = vld [vmem:[%s790 + $0x10] sm:$0xf]
    %v796 = vld [vmem:[%s790 + $0x14] sm:$0xf]
    %v797 = vld [vmem:[%s790 + $0x18] sm:$0xf]
    %v798 = vld [vmem:[%s790 + $0x1c] sm:$0xf]
    %v799 = vld [vmem:[%s790 + $0x20] sm:$0xf]
    %v800 = vld [vmem:[%s790 + $0x24] sm:$0xf]
    %v801 = vld [vmem:[%s790 + $0x28] sm:$0xf]
    %v802 = vld [vmem:[%s790 + $0x2c] sm:$0xf]
    %v803 = vld [vmem:[%s790 + $0x30] sm:$0xf]
    %v804 = vld [vmem:[%s790 + $0x34] sm:$0xf]
    %v805 = vld [vmem:[%s790 + $0x38] sm:$0xf]
    %v806 = vld [vmem:[%s790 + $0x3c] sm:$0xf]
    %s807 = scalar_lea.vmem %s7, 2
    %v808 = vld [vmem:[%s807] sm:$0x1]
    %v810 = vlaneseq
    %v811 = vshrl.u32 %v810, 7
    %v812 = vsub.s32 0, %v811
    %v813 = vrot.slane %v808, %v812
    %v831 = vunpack.c.l.b16 %v791
    %v832 = vunpack.c.l.b16 %v792
    %v833 = vunpack.c.l.b16 %v793
    %v834 = vunpack.c.l.b16 %v794
    %v835 = vunpack.c.l.b16 %v795
    %v836 = vunpack.c.l.b16 %v796
    %v837 = vunpack.c.l.b16 %v797
    %v838 = vunpack.c.l.b16 %v798
    %v839 = vunpack.c.l.b16 %v799
    %v840 = vunpack.c.l.b16 %v800
    %v841 = vunpack.c.l.b16 %v801
    %v842 = vunpack.c.l.b16 %v802
    %v843 = vunpack.c.l.b16 %v803
    %v844 = vunpack.c.l.b16 %v804
    %v845 = vunpack.c.l.b16 %v805
    %v846 = vunpack.c.l.b16 %v806
    %v847 = vpack.c.b16 %v832, %v831
    %v848 = vpack.c.b16 %v834, %v833
    %v849 = vpack.c.b16 %v836, %v835
    %v850 = vpack.c.b16 %v838, %v837
    %v851 = vpack.c.b16 %v840, %v839
    %v852 = vpack.c.b16 %v842, %v841
    %v853 = vpack.c.b16 %v844, %v843
    %v854 = vpack.c.b16 %v846, %v845
    %863 = vmatprep.subr.bf16.mxu0 0
    %864 = vmatpush1.bf16.msra.mxu0 %v854
    %865 = vmatprep.subr.bf16.mxu0 0
    %866 = vmatpush1.bf16.msra.mxu0 %v853
    %867 = vmatprep.subr.bf16.mxu0 0
    %868 = vmatpush1.bf16.msra.mxu0 %v852
    %869 = vmatprep.subr.bf16.mxu0 0
    %870 = vmatpush1.bf16.msra.mxu0 %v851
    %871 = vmatprep.subr.bf16.mxu0 0
    %872 = vmatpush1.bf16.msra.mxu0 %v850
    %873 = vmatprep.subr.bf16.mxu0 0
    %874 = vmatpush1.bf16.msra.mxu0 %v849
    %875 = vmatprep.subr.bf16.mxu0 0
    %876 = vmatpush1.bf16.msra.mxu0 %v848
    %877 = vmatprep.subr.bf16.mxu0 0
    %878 = vmatpush1.bf16.msra.mxu0 %v847
    %879 = vmatprep.subr.bf16.mxu0 0
    %880 = vmatpush2.bf16.msra.mxu0 0
    %881 = vmatprep.subr.bf16.mxu0 0
    %882 = vmatpush2.bf16.msra.mxu0 0
    %883 = vmatprep.subr.bf16.mxu0 0
    %884 = vmatpush2.bf16.msra.mxu0 0
    %885 = vmatprep.subr.bf16.mxu0 0
    %886 = vmatpush2.bf16.msra.mxu0 0
    %887 = vmatprep.subr.bf16.mxu0 0
    %888 = vmatpush2.bf16.msra.mxu0 0
    %889 = vmatprep.subr.bf16.mxu0 0
    %890 = vmatpush2.bf16.msra.mxu0 0
    %891 = vmatprep.subr.bf16.mxu0 0
    %892 = vmatpush2.bf16.msra.mxu0 0
    %893 = vmatprep.subr.bf16.mxu0 0
    %894 = vmatpush2.bf16.msra.mxu0 0
    %895 = vmatprep.mubr.bf16.mxu0 0
    %896 = vmatmul.mubr.bf16.gmra.mxu0 %v789
    %v897 = vpop.f32.mrf.mxu0
    %v898 = vadd.f32 %v813, %v897
    %v899 = vpop.f32.mrf.mxu0
    %v900 = vpop.f32.mrf.mxu0
    %v901 = vpop.f32.mrf.mxu0
    %902 = vdwg.mxu0
    %vm903 = vcmp.gt.f32.partialorder %v898, 0.0
    %v904 = vmul.f32 %v898, 0.2
    %v905 = vsel %vm903, %v898, %v904
    %v906 = vpack.c.bf16 %v905, %v905
    %v907 = vld [vmem:[#allocation8] sm:$0xf]
    %v908 = vld [vmem:[#allocation8 + $0x4] sm:$0xf]
    %v909 = vld [vmem:[#allocation8 + $0x8] sm:$0xf]
    %v910 = vld [vmem:[#allocation8 + $0xc] sm:$0xf]
    %v911 = vld [vmem:[#allocation8 + $0x10] sm:$0xf]
    %v912 = vld [vmem:[#allocation8 + $0x14] sm:$0xf]
    %v913 = vld [vmem:[#allocation8 + $0x18] sm:$0xf]
    %v914 = vld [vmem:[#allocation8 + $0x1c] sm:$0xf]
    %v915 = vld [vmem:[#allocation8 + $0x20] sm:$0xf]
    %v916 = vld [vmem:[#allocation8 + $0x24] sm:$0xf]
    %v917 = vld [vmem:[#allocation8 + $0x28] sm:$0xf]
    %v918 = vld [vmem:[#allocation8 + $0x2c] sm:$0xf]
    %v919 = vld [vmem:[#allocation8 + $0x30] sm:$0xf]
    %v920 = vld [vmem:[#allocation8 + $0x34] sm:$0xf]
    %v921 = vld [vmem:[#allocation8 + $0x38] sm:$0xf]
    %v922 = vld [vmem:[#allocation8 + $0x3c] sm:$0xf]
    %v923 = vld [vmem:[%s9] sm:$0x1]
    %v925 = vlaneseq
    %v926 = vshrl.u32 %v925, 7
    %v927 = vsub.s32 0, %v926
    %v928 = vrot.slane %v923, %v927
    %v946 = vunpack.c.l.b16 %v907
    %v947 = vunpack.c.l.b16 %v908
    %v948 = vunpack.c.l.b16 %v909
    %v949 = vunpack.c.l.b16 %v910
    %v950 = vunpack.c.l.b16 %v911
    %v951 = vunpack.c.l.b16 %v912
    %v952 = vunpack.c.l.b16 %v913
    %v953 = vunpack.c.l.b16 %v914
    %v954 = vunpack.c.l.b16 %v915
    %v955 = vunpack.c.l.b16 %v916
    %v956 = vunpack.c.l.b16 %v917
    %v957 = vunpack.c.l.b16 %v918
    %v958 = vunpack.c.l.b16 %v919
    %v959 = vunpack.c.l.b16 %v920
    %v960 = vunpack.c.l.b16 %v921
    %v961 = vunpack.c.l.b16 %v922
    %v962 = vpack.c.b16 %v947, %v946
    %v963 = vpack.c.b16 %v949, %v948
    %v964 = vpack.c.b16 %v951, %v950
    %v965 = vpack.c.b16 %v953, %v952
    %v966 = vpack.c.b16 %v955, %v954
    %v967 = vpack.c.b16 %v957, %v956
    %v968 = vpack.c.b16 %v959, %v958
    %v969 = vpack.c.b16 %v961, %v960
    %978 = vmatprep.subr.bf16.mxu0 0
    %979 = vmatpush1.bf16.msra.mxu0 %v969
    %980 = vmatprep.subr.bf16.mxu0 0
    %981 = vmatpush1.bf16.msra.mxu0 %v968
    %982 = vmatprep.subr.bf16.mxu0 0
    %983 = vmatpush1.bf16.msra.mxu0 %v967
    %984 = vmatprep.subr.bf16.mxu0 0
    %985 = vmatpush1.bf16.msra.mxu0 %v966
    %986 = vmatprep.subr.bf16.mxu0 0
    %987 = vmatpush1.bf16.msra.mxu0 %v965
    %988 = vmatprep.subr.bf16.mxu0 0
    %989 = vmatpush1.bf16.msra.mxu0 %v964
    %990 = vmatprep.subr.bf16.mxu0 0
    %991 = vmatpush1.bf16.msra.mxu0 %v963
    %992 = vmatprep.subr.bf16.mxu0 0
    %993 = vmatpush1.bf16.msra.mxu0 %v962
    %994 = vmatprep.subr.bf16.mxu0 0
    %995 = vmatpush2.bf16.msra.mxu0 0
    %996 = vmatprep.subr.bf16.mxu0 0
    %997 = vmatpush2.bf16.msra.mxu0 0
    %998 = vmatprep.subr.bf16.mxu0 0
    %999 = vmatpush2.bf16.msra.mxu0 0
    %1000 = vmatprep.subr.bf16.mxu0 0
    %1001 = vmatpush2.bf16.msra.mxu0 0
    %1002 = vmatprep.subr.bf16.mxu0 0
    %1003 = vmatpush2.bf16.msra.mxu0 0
    %1004 = vmatprep.subr.bf16.mxu0 0
    %1005 = vmatpush2.bf16.msra.mxu0 0
    %1006 = vmatprep.subr.bf16.mxu0 0
    %1007 = vmatpush2.bf16.msra.mxu0 0
    %1008 = vmatprep.subr.bf16.mxu0 0
    %1009 = vmatpush2.bf16.msra.mxu0 0
    %1010 = vmatprep.mubr.bf16.mxu0 0
    %1011 = vmatmul.mubr.bf16.gmra.mxu0 %v906
    %v1012 = vpop.f32.mrf.mxu0
    %v1013 = vadd.f32 %v928, %v1012
    %v1014 = vpop.f32.mrf.mxu0
    %v1015 = vpop.f32.mrf.mxu0
    %v1016 = vpop.f32.mrf.mxu0
    %1017 = vdwg.mxu0
    %vm1018 = vcmp.gt.f32.partialorder %v1013, 0.0
    %v1019 = vmul.f32 %v1013, 0.2
    %v1020 = vsel %vm1018, %v1013, %v1019
    %1022 = vset.pattern.permute.xlu0 0
    %1023 = vperm.xlu0 %1022, %v556
    %v1024 = vpop.permute.xlu0 %1023
    %v1026 = vmul.f32 %v1024, %v1020
    %v1027 = vadd.f32 %v1026, 0.0
    %s1028 = scalar_lea.vmem [#allocation7], 192
    %v1029 = vld [vmem:[%s1028] sm:$0xf]
    %v1030 = vld [vmem:[%s1028 + $0x4] sm:$0xf]
    %v1031 = vld [vmem:[%s1028 + $0x8] sm:$0xf]
    %v1032 = vld [vmem:[%s1028 + $0xc] sm:$0xf]
    %v1033 = vld [vmem:[%s1028 + $0x10] sm:$0xf]
    %v1034 = vld [vmem:[%s1028 + $0x14] sm:$0xf]
    %v1035 = vld [vmem:[%s1028 + $0x18] sm:$0xf]
    %v1036 = vld [vmem:[%s1028 + $0x1c] sm:$0xf]
    %v1037 = vld [vmem:[%s1028 + $0x20] sm:$0xf]
    %v1038 = vld [vmem:[%s1028 + $0x24] sm:$0xf]
    %v1039 = vld [vmem:[%s1028 + $0x28] sm:$0xf]
    %v1040 = vld [vmem:[%s1028 + $0x2c] sm:$0xf]
    %v1041 = vld [vmem:[%s1028 + $0x30] sm:$0xf]
    %v1042 = vld [vmem:[%s1028 + $0x34] sm:$0xf]
    %v1043 = vld [vmem:[%s1028 + $0x38] sm:$0xf]
    %v1044 = vld [vmem:[%s1028 + $0x3c] sm:$0xf]
    %s1045 = scalar_lea.vmem %s7, 3
    %v1046 = vld [vmem:[%s1045] sm:$0x1]
    %v1048 = vlaneseq
    %v1049 = vshrl.u32 %v1048, 7
    %v1050 = vsub.s32 0, %v1049
    %v1051 = vrot.slane %v1046, %v1050
    %v1069 = vunpack.c.l.b16 %v1029
    %v1070 = vunpack.c.l.b16 %v1030
    %v1071 = vunpack.c.l.b16 %v1031
    %v1072 = vunpack.c.l.b16 %v1032
    %v1073 = vunpack.c.l.b16 %v1033
    %v1074 = vunpack.c.l.b16 %v1034
    %v1075 = vunpack.c.l.b16 %v1035
    %v1076 = vunpack.c.l.b16 %v1036
    %v1077 = vunpack.c.l.b16 %v1037
    %v1078 = vunpack.c.l.b16 %v1038
    %v1079 = vunpack.c.l.b16 %v1039
    %v1080 = vunpack.c.l.b16 %v1040
    %v1081 = vunpack.c.l.b16 %v1041
    %v1082 = vunpack.c.l.b16 %v1042
    %v1083 = vunpack.c.l.b16 %v1043
    %v1084 = vunpack.c.l.b16 %v1044
    %v1085 = vpack.c.b16 %v1070, %v1069
    %v1086 = vpack.c.b16 %v1072, %v1071
    %v1087 = vpack.c.b16 %v1074, %v1073
    %v1088 = vpack.c.b16 %v1076, %v1075
    %v1089 = vpack.c.b16 %v1078, %v1077
    %v1090 = vpack.c.b16 %v1080, %v1079
    %v1091 = vpack.c.b16 %v1082, %v1081
    %v1092 = vpack.c.b16 %v1084, %v1083
    %1101 = vmatprep.subr.bf16.mxu0 0
    %1102 = vmatpush1.bf16.msra.mxu0 %v1092
    %1103 = vmatprep.subr.bf16.mxu0 0
    %1104 = vmatpush1.bf16.msra.mxu0 %v1091
    %1105 = vmatprep.subr.bf16.mxu0 0
    %1106 = vmatpush1.bf16.msra.mxu0 %v1090
    %1107 = vmatprep.subr.bf16.mxu0 0
    %1108 = vmatpush1.bf16.msra.mxu0 %v1089
    %1109 = vmatprep.subr.bf16.mxu0 0
    %1110 = vmatpush1.bf16.msra.mxu0 %v1088
    %1111 = vmatprep.subr.bf16.mxu0 0
    %1112 = vmatpush1.bf16.msra.mxu0 %v1087
    %1113 = vmatprep.subr.bf16.mxu0 0
    %1114 = vmatpush1.bf16.msra.mxu0 %v1086
    %1115 = vmatprep.subr.bf16.mxu0 0
    %1116 = vmatpush1.bf16.msra.mxu0 %v1085
    %1117 = vmatprep.subr.bf16.mxu0 0
    %1118 = vmatpush2.bf16.msra.mxu0 0
    %1119 = vmatprep.subr.bf16.mxu0 0
    %1120 = vmatpush2.bf16.msra.mxu0 0
    %1121 = vmatprep.subr.bf16.mxu0 0
    %1122 = vmatpush2.bf16.msra.mxu0 0
    %1123 = vmatprep.subr.bf16.mxu0 0
    %1124 = vmatpush2.bf16.msra.mxu0 0
    %1125 = vmatprep.subr.bf16.mxu0 0
    %1126 = vmatpush2.bf16.msra.mxu0 0
    %1127 = vmatprep.subr.bf16.mxu0 0
    %1128 = vmatpush2.bf16.msra.mxu0 0
    %1129 = vmatprep.subr.bf16.mxu0 0
    %1130 = vmatpush2.bf16.msra.mxu0 0
    %1131 = vmatprep.subr.bf16.mxu0 0
    %1132 = vmatpush2.bf16.msra.mxu0 0
    %1133 = vmatprep.mubr.bf16.mxu0 0
    %1134 = vmatmul.mubr.bf16.gmra.mxu0 %v557
    %v1135 = vpop.f32.mrf.mxu0
    %v1136 = vadd.f32 %v1051, %v1135
    %v1137 = vpop.f32.mrf.mxu0
    %v1138 = vpop.f32.mrf.mxu0
    %v1139 = vpop.f32.mrf.mxu0
    %1140 = vdwg.mxu0
    %vm1141 = vcmp.gt.f32.partialorder %v1136, 0.0
    %v1142 = vmul.f32 %v1136, 0.2
    %v1143 = vsel %vm1141, %v1136, %v1142
    %v1144 = vpack.c.bf16 %v1143, %v1143
    %s1145 = scalar_lea.vmem [#allocation7], 256
    %v1146 = vld [vmem:[%s1145] sm:$0xf]
    %v1147 = vld [vmem:[%s1145 + $0x4] sm:$0xf]
    %v1148 = vld [vmem:[%s1145 + $0x8] sm:$0xf]
    %v1149 = vld [vmem:[%s1145 + $0xc] sm:$0xf]
    %v1150 = vld [vmem:[%s1145 + $0x10] sm:$0xf]
    %v1151 = vld [vmem:[%s1145 + $0x14] sm:$0xf]
    %v1152 = vld [vmem:[%s1145 + $0x18] sm:$0xf]
    %v1153 = vld [vmem:[%s1145 + $0x1c] sm:$0xf]
    %v1154 = vld [vmem:[%s1145 + $0x20] sm:$0xf]
    %v1155 = vld [vmem:[%s1145 + $0x24] sm:$0xf]
    %v1156 = vld [vmem:[%s1145 + $0x28] sm:$0xf]
    %v1157 = vld [vmem:[%s1145 + $0x2c] sm:$0xf]
    %v1158 = vld [vmem:[%s1145 + $0x30] sm:$0xf]
    %v1159 = vld [vmem:[%s1145 + $0x34] sm:$0xf]
    %v1160 = vld [vmem:[%s1145 + $0x38] sm:$0xf]
    %v1161 = vld [vmem:[%s1145 + $0x3c] sm:$0xf]
    %s1162 = scalar_lea.vmem %s7, 4
    %v1163 = vld [vmem:[%s1162] sm:$0x1]
    %v1165 = vlaneseq
    %v1166 = vshrl.u32 %v1165, 7
    %v1167 = vsub.s32 0, %v1166
    %v1168 = vrot.slane %v1163, %v1167
    %v1186 = vunpack.c.l.b16 %v1146
    %v1187 = vunpack.c.l.b16 %v1147
    %v1188 = vunpack.c.l.b16 %v1148
    %v1189 = vunpack.c.l.b16 %v1149
    %v1190 = vunpack.c.l.b16 %v1150
    %v1191 = vunpack.c.l.b16 %v1151
    %v1192 = vunpack.c.l.b16 %v1152
    %v1193 = vunpack.c.l.b16 %v1153
    %v1194 = vunpack.c.l.b16 %v1154
    %v1195 = vunpack.c.l.b16 %v1155
    %v1196 = vunpack.c.l.b16 %v1156
    %v1197 = vunpack.c.l.b16 %v1157
    %v1198 = vunpack.c.l.b16 %v1158
    %v1199 = vunpack.c.l.b16 %v1159
    %v1200 = vunpack.c.l.b16 %v1160
    %v1201 = vunpack.c.l.b16 %v1161
    %v1202 = vpack.c.b16 %v1187, %v1186
    %v1203 = vpack.c.b16 %v1189, %v1188
    %v1204 = vpack.c.b16 %v1191, %v1190
    %v1205 = vpack.c.b16 %v1193, %v1192
    %v1206 = vpack.c.b16 %v1195, %v1194
    %v1207 = vpack.c.b16 %v1197, %v1196
    %v1208 = vpack.c.b16 %v1199, %v1198
    %v1209 = vpack.c.b16 %v1201, %v1200
    %1218 = vmatprep.subr.bf16.mxu0 0
    %1219 = vmatpush1.bf16.msra.mxu0 %v1209
    %1220 = vmatprep.subr.bf16.mxu0 0
    %1221 = vmatpush1.bf16.msra.mxu0 %v1208
    %1222 = vmatprep.subr.bf16.mxu0 0
    %1223 = vmatpush1.bf16.msra.mxu0 %v1207
    %1224 = vmatprep.subr.bf16.mxu0 0
    %1225 = vmatpush1.bf16.msra.mxu0 %v1206
    %1226 = vmatprep.subr.bf16.mxu0 0
    %1227 = vmatpush1.bf16.msra.mxu0 %v1205
    %1228 = vmatprep.subr.bf16.mxu0 0
    %1229 = vmatpush1.bf16.msra.mxu0 %v1204
    %1230 = vmatprep.subr.bf16.mxu0 0
    %1231 = vmatpush1.bf16.msra.mxu0 %v1203
    %1232 = vmatprep.subr.bf16.mxu0 0
    %1233 = vmatpush1.bf16.msra.mxu0 %v1202
    %1234 = vmatprep.subr.bf16.mxu0 0
    %1235 = vmatpush2.bf16.msra.mxu0 0
    %1236 = vmatprep.subr.bf16.mxu0 0
    %1237 = vmatpush2.bf16.msra.mxu0 0
    %1238 = vmatprep.subr.bf16.mxu0 0
    %1239 = vmatpush2.bf16.msra.mxu0 0
    %1240 = vmatprep.subr.bf16.mxu0 0
    %1241 = vmatpush2.bf16.msra.mxu0 0
    %1242 = vmatprep.subr.bf16.mxu0 0
    %1243 = vmatpush2.bf16.msra.mxu0 0
    %1244 = vmatprep.subr.bf16.mxu0 0
    %1245 = vmatpush2.bf16.msra.mxu0 0
    %1246 = vmatprep.subr.bf16.mxu0 0
    %1247 = vmatpush2.bf16.msra.mxu0 0
    %1248 = vmatprep.subr.bf16.mxu0 0
    %1249 = vmatpush2.bf16.msra.mxu0 0
    %1250 = vmatprep.mubr.bf16.mxu0 0
    %1251 = vmatmul.mubr.bf16.gmra.mxu0 %v1144
    %v1252 = vpop.f32.mrf.mxu0
    %v1253 = vadd.f32 %v1168, %v1252
    %v1254 = vpop.f32.mrf.mxu0
    %v1255 = vpop.f32.mrf.mxu0
    %v1256 = vpop.f32.mrf.mxu0
    %1257 = vdwg.mxu0
    %vm1258 = vcmp.gt.f32.partialorder %v1253, 0.0
    %v1259 = vmul.f32 %v1253, 0.2
    %v1260 = vsel %vm1258, %v1253, %v1259
    %v1261 = vpack.c.bf16 %v1260, %v1260
    %s1262 = scalar_lea.vmem [#allocation7], 320
    %v1263 = vld [vmem:[%s1262] sm:$0xf]
    %v1264 = vld [vmem:[%s1262 + $0x4] sm:$0xf]
    %v1265 = vld [vmem:[%s1262 + $0x8] sm:$0xf]
    %v1266 = vld [vmem:[%s1262 + $0xc] sm:$0xf]
    %v1267 = vld [vmem:[%s1262 + $0x10] sm:$0xf]
    %v1268 = vld [vmem:[%s1262 + $0x14] sm:$0xf]
    %v1269 = vld [vmem:[%s1262 + $0x18] sm:$0xf]
    %v1270 = vld [vmem:[%s1262 + $0x1c] sm:$0xf]
    %v1271 = vld [vmem:[%s1262 + $0x20] sm:$0xf]
    %v1272 = vld [vmem:[%s1262 + $0x24] sm:$0xf]
    %v1273 = vld [vmem:[%s1262 + $0x28] sm:$0xf]
    %v1274 = vld [vmem:[%s1262 + $0x2c] sm:$0xf]
    %v1275 = vld [vmem:[%s1262 + $0x30] sm:$0xf]
    %v1276 = vld [vmem:[%s1262 + $0x34] sm:$0xf]
    %v1277 = vld [vmem:[%s1262 + $0x38] sm:$0xf]
    %v1278 = vld [vmem:[%s1262 + $0x3c] sm:$0xf]
    %s1279 = scalar_lea.vmem %s7, 5
    %v1280 = vld [vmem:[%s1279] sm:$0x1]
    %v1282 = vlaneseq
    %v1283 = vshrl.u32 %v1282, 7
    %v1284 = vsub.s32 0, %v1283
    %v1285 = vrot.slane %v1280, %v1284
    %v1303 = vunpack.c.l.b16 %v1263
    %v1304 = vunpack.c.l.b16 %v1264
    %v1305 = vunpack.c.l.b16 %v1265
    %v1306 = vunpack.c.l.b16 %v1266
    %v1307 = vunpack.c.l.b16 %v1267
    %v1308 = vunpack.c.l.b16 %v1268
    %v1309 = vunpack.c.l.b16 %v1269
    %v1310 = vunpack.c.l.b16 %v1270
    %v1311 = vunpack.c.l.b16 %v1271
    %v1312 = vunpack.c.l.b16 %v1272
    %v1313 = vunpack.c.l.b16 %v1273
    %v1314 = vunpack.c.l.b16 %v1274
    %v1315 = vunpack.c.l.b16 %v1275
    %v1316 = vunpack.c.l.b16 %v1276
    %v1317 = vunpack.c.l.b16 %v1277
    %v1318 = vunpack.c.l.b16 %v1278
    %v1319 = vpack.c.b16 %v1304, %v1303
    %v1320 = vpack.c.b16 %v1306, %v1305
    %v1321 = vpack.c.b16 %v1308, %v1307
    %v1322 = vpack.c.b16 %v1310, %v1309
    %v1323 = vpack.c.b16 %v1312, %v1311
    %v1324 = vpack.c.b16 %v1314, %v1313
    %v1325 = vpack.c.b16 %v1316, %v1315
    %v1326 = vpack.c.b16 %v1318, %v1317
    %1335 = vmatprep.subr.bf16.mxu0 0
    %1336 = vmatpush1.bf16.msra.mxu0 %v1326
    %1337 = vmatprep.subr.bf16.mxu0 0
    %1338 = vmatpush1.bf16.msra.mxu0 %v1325
    %1339 = vmatprep.subr.bf16.mxu0 0
    %1340 = vmatpush1.bf16.msra.mxu0 %v1324
    %1341 = vmatprep.subr.bf16.mxu0 0
    %1342 = vmatpush1.bf16.msra.mxu0 %v1323
    %1343 = vmatprep.subr.bf16.mxu0 0
    %1344 = vmatpush1.bf16.msra.mxu0 %v1322
    %1345 = vmatprep.subr.bf16.mxu0 0
    %1346 = vmatpush1.bf16.msra.mxu0 %v1321
    %1347 = vmatprep.subr.bf16.mxu0 0
    %1348 = vmatpush1.bf16.msra.mxu0 %v1320
    %1349 = vmatprep.subr.bf16.mxu0 0
    %1350 = vmatpush1.bf16.msra.mxu0 %v1319
    %1351 = vmatprep.subr.bf16.mxu0 0
    %1352 = vmatpush2.bf16.msra.mxu0 0
    %1353 = vmatprep.subr.bf16.mxu0 0
    %1354 = vmatpush2.bf16.msra.mxu0 0
    %1355 = vmatprep.subr.bf16.mxu0 0
    %1356 = vmatpush2.bf16.msra.mxu0 0
    %1357 = vmatprep.subr.bf16.mxu0 0
    %1358 = vmatpush2.bf16.msra.mxu0 0
    %1359 = vmatprep.subr.bf16.mxu0 0
    %1360 = vmatpush2.bf16.msra.mxu0 0
    %1361 = vmatprep.subr.bf16.mxu0 0
    %1362 = vmatpush2.bf16.msra.mxu0 0
    %1363 = vmatprep.subr.bf16.mxu0 0
    %1364 = vmatpush2.bf16.msra.mxu0 0
    %1365 = vmatprep.subr.bf16.mxu0 0
    %1366 = vmatpush2.bf16.msra.mxu0 0
    %1367 = vmatprep.mubr.bf16.mxu0 0
    %1368 = vmatmul.mubr.bf16.gmra.mxu0 %v1261
    %v1369 = vpop.f32.mrf.mxu0
    %v1370 = vadd.f32 %v1285, %v1369
    %v1371 = vpop.f32.mrf.mxu0
    %v1372 = vpop.f32.mrf.mxu0
    %v1373 = vpop.f32.mrf.mxu0
    %1374 = vdwg.mxu0
    %vm1375 = vcmp.gt.f32.partialorder %v1370, 0.0
    %v1376 = vmul.f32 %v1370, 0.2
    %v1377 = vsel %vm1375, %v1370, %v1376
    %v1378 = vpack.c.bf16 %v1377, %v1377
    %s1379 = scalar_lea.vmem [#allocation8], 64
    %v1380 = vld [vmem:[%s1379] sm:$0xf]
    %v1381 = vld [vmem:[%s1379 + $0x4] sm:$0xf]
    %v1382 = vld [vmem:[%s1379 + $0x8] sm:$0xf]
    %v1383 = vld [vmem:[%s1379 + $0xc] sm:$0xf]
    %v1384 = vld [vmem:[%s1379 + $0x10] sm:$0xf]
    %v1385 = vld [vmem:[%s1379 + $0x14] sm:$0xf]
    %v1386 = vld [vmem:[%s1379 + $0x18] sm:$0xf]
    %v1387 = vld [vmem:[%s1379 + $0x1c] sm:$0xf]
    %v1388 = vld [vmem:[%s1379 + $0x20] sm:$0xf]
    %v1389 = vld [vmem:[%s1379 + $0x24] sm:$0xf]
    %v1390 = vld [vmem:[%s1379 + $0x28] sm:$0xf]
    %v1391 = vld [vmem:[%s1379 + $0x2c] sm:$0xf]
    %v1392 = vld [vmem:[%s1379 + $0x30] sm:$0xf]
    %v1393 = vld [vmem:[%s1379 + $0x34] sm:$0xf]
    %v1394 = vld [vmem:[%s1379 + $0x38] sm:$0xf]
    %v1395 = vld [vmem:[%s1379 + $0x3c] sm:$0xf]
    %s1396 = scalar_lea.vmem %s9, 1
    %v1397 = vld [vmem:[%s1396] sm:$0x1]
    %v1399 = vlaneseq
    %v1400 = vshrl.u32 %v1399, 7
    %v1401 = vsub.s32 0, %v1400
    %v1402 = vrot.slane %v1397, %v1401
    %v1420 = vunpack.c.l.b16 %v1380
    %v1421 = vunpack.c.l.b16 %v1381
    %v1422 = vunpack.c.l.b16 %v1382
    %v1423 = vunpack.c.l.b16 %v1383
    %v1424 = vunpack.c.l.b16 %v1384
    %v1425 = vunpack.c.l.b16 %v1385
    %v1426 = vunpack.c.l.b16 %v1386
    %v1427 = vunpack.c.l.b16 %v1387
    %v1428 = vunpack.c.l.b16 %v1388
    %v1429 = vunpack.c.l.b16 %v1389
    %v1430 = vunpack.c.l.b16 %v1390
    %v1431 = vunpack.c.l.b16 %v1391
    %v1432 = vunpack.c.l.b16 %v1392
    %v1433 = vunpack.c.l.b16 %v1393
    %v1434 = vunpack.c.l.b16 %v1394
    %v1435 = vunpack.c.l.b16 %v1395
    %v1436 = vpack.c.b16 %v1421, %v1420
    %v1437 = vpack.c.b16 %v1423, %v1422
    %v1438 = vpack.c.b16 %v1425, %v1424
    %v1439 = vpack.c.b16 %v1427, %v1426
    %v1440 = vpack.c.b16 %v1429, %v1428
    %v1441 = vpack.c.b16 %v1431, %v1430
    %v1442 = vpack.c.b16 %v1433, %v1432
    %v1443 = vpack.c.b16 %v1435, %v1434
    %1452 = vmatprep.subr.bf16.mxu0 0
    %1453 = vmatpush1.bf16.msra.mxu0 %v1443
    %1454 = vmatprep.subr.bf16.mxu0 0
    %1455 = vmatpush1.bf16.msra.mxu0 %v1442
    %1456 = vmatprep.subr.bf16.mxu0 0
    %1457 = vmatpush1.bf16.msra.mxu0 %v1441
    %1458 = vmatprep.subr.bf16.mxu0 0
    %1459 = vmatpush1.bf16.msra.mxu0 %v1440
    %1460 = vmatprep.subr.bf16.mxu0 0
    %1461 = vmatpush1.bf16.msra.mxu0 %v1439
    %1462 = vmatprep.subr.bf16.mxu0 0
    %1463 = vmatpush1.bf16.msra.mxu0 %v1438
    %1464 = vmatprep.subr.bf16.mxu0 0
    %1465 = vmatpush1.bf16.msra.mxu0 %v1437
    %1466 = vmatprep.subr.bf16.mxu0 0
    %1467 = vmatpush1.bf16.msra.mxu0 %v1436
    %1468 = vmatprep.subr.bf16.mxu0 0
    %1469 = vmatpush2.bf16.msra.mxu0 0
    %1470 = vmatprep.subr.bf16.mxu0 0
    %1471 = vmatpush2.bf16.msra.mxu0 0
    %1472 = vmatprep.subr.bf16.mxu0 0
    %1473 = vmatpush2.bf16.msra.mxu0 0
    %1474 = vmatprep.subr.bf16.mxu0 0
    %1475 = vmatpush2.bf16.msra.mxu0 0
    %1476 = vmatprep.subr.bf16.mxu0 0
    %1477 = vmatpush2.bf16.msra.mxu0 0
    %1478 = vmatprep.subr.bf16.mxu0 0
    %1479 = vmatpush2.bf16.msra.mxu0 0
    %1480 = vmatprep.subr.bf16.mxu0 0
    %1481 = vmatpush2.bf16.msra.mxu0 0
    %1482 = vmatprep.subr.bf16.mxu0 0
    %1483 = vmatpush2.bf16.msra.mxu0 0
    %1484 = vmatprep.mubr.bf16.mxu0 0
    %1485 = vmatmul.mubr.bf16.gmra.mxu0 %v1378
    %v1486 = vpop.f32.mrf.mxu0
    %v1487 = vadd.f32 %v1402, %v1486
    %v1488 = vpop.f32.mrf.mxu0
    %v1489 = vpop.f32.mrf.mxu0
    %v1490 = vpop.f32.mrf.mxu0
    %1491 = vdwg.mxu0
    %vm1492 = vcmp.gt.f32.partialorder %v1487, 0.0
    %v1493 = vmul.f32 %v1487, 0.2
    %v1494 = vsel %vm1492, %v1487, %v1493
    %1495 = vset.pattern.permute.xlu0 1
    %1496 = vperm.xlu0 %1495, %v556
    %v1497 = vpop.permute.xlu0 %1496
    %v1499 = vmul.f32 %v1497, %v1494
    %v1500 = vadd.f32 %v1027, %v1499
    %1501 = vst [vmem:[#allocation10] sm:$0xff] %v1500
    // Predicated region
    $region58: #{mapping_network_pallas.1} parent=1 // pred_check
      _
    $region59: #{mapping_network_pallas.1} parent=1 // pred_check_branch
      %1503 = sbr.rel (0) target = $region61
    $region60: #{mapping_network_pallas.1} parent=1 // pred_region
      %s1505 = ssub.s32 128, 128
      %1506 = vsyncadd [#allocation4], %s1505
      %s1508 = sshll.u32 [#allocation10], 4
      %s1509 = int_to_ptr.vmem [resolvable:$true] %s1508
      %1511 = dma.vmem_to_hbm [thread:$0]  %s1509, 128, %s10, [#allocation4]
    $region61: #{mapping_network_pallas.1} parent=1 // pred_fallthru
      _
    // Predicated region
    $region62: #{mapping_network_pallas.1} parent=1 // pred_check
      _
    $region63: #{mapping_network_pallas.1} parent=1 // pred_check_branch
      %1513 = sbr.rel (0) target = $region65
    $region64: #{mapping_network_pallas.1} parent=1 // pred_region
      %1514 = dma.done [#allocation4], 128
    $region65: #{mapping_network_pallas.1} parent=1 // pred_fallthru
      _
    %1515 = vsyncpa [#allocation3], 1
    %1516 = vsyncpa [#allocation6], 1
    %1517 = vsyncpa [#allocation9], 1
    %1518 = vsyncpa [#allocation4], 1

</llo_original>
